<compile_context>
chip_gen: v7x
topology: tpu7x:2x2x1
jax: 0.10.0
libtpu: 0.0.40
codegen_flags: <defaults>
</compile_context>

<pallas_src>
import jax
import jax.numpy as jnp
from jax import lax
from jax.experimental import pallas as pl
from jax.experimental.pallas import tpu as pltpu


# ----------------------------- model config (small) -----------------------------
DIM = 64
INTER_DIM = 128
N_HEADS = 2
Q_LORA_RANK = 32
KV_LORA_RANK = 32
QK_NOPE_HEAD_DIM = 32
QK_ROPE_HEAD_DIM = 16
QK_HEAD_DIM = QK_NOPE_HEAD_DIM + QK_ROPE_HEAD_DIM
V_HEAD_DIM = 32
ROPE_THETA = 10000.0
SOFTMAX_SCALE = QK_HEAD_DIM ** (-0.5)   # max_seq_len <= original_seq_len -> no mscale

BATCH = 2
SEQ = 8


# ----------------------------- fused block kernel -----------------------------
def _block_kernel(
    x_ref,                      # (S, D)     current batch row-slab
    alpha_ref,                  # SMEM (4,)  [attn, q, kv, ffn] DyT alphas
    attn_w_ref, attn_b_ref,     # (1, D)
    q_w_ref, q_b_ref,           # (1, Q_LORA_RANK)
    kv_w_ref, kv_b_ref,         # (1, KV_LORA_RANK)
    ffn_w_ref, ffn_b_ref,       # (1, D)
    wa_ref, ba_ref,             # fused [wq_a | wkv_a]   (D, QLR+KVLR+ROPE)
    wqb_ref, bqb_ref,           # (QLR, H*QK_HEAD_DIM)
    wkvb_ref, bkvb_ref,         # (KVLR, H*(NOPE+V))
    wo_ref, bo_ref,             # (H*V, D)
    w13_ref, b13_ref,           # fused [w1 | w3]        (D, 2*INTER)
    w2_ref, b2_ref,             # (INTER, D)
    cos_ref, sin_ref,           # (S, ROPE/2)
    o_ref,                      # (S, D)
):
    f32 = jnp.float32
    S = o_ref.shape[0]
    x = x_ref[...].astype(f32)

    def dyt(v, alpha, w, b):
        return w * jnp.tanh(alpha * v) + b

    # ---- attention branch ----
    h = dyt(x, alpha_ref[0], attn_w_ref[...], attn_b_ref[...])

    # fused wq_a + wkv_a projection
    a_proj = jnp.dot(h, wa_ref[...], preferred_element_type=f32) + ba_ref[...]
    q_lat = a_proj[:, :Q_LORA_RANK]
    kv_lat = a_proj[:, Q_LORA_RANK:Q_LORA_RANK + KV_LORA_RANK]
    k_pe_raw = a_proj[:, Q_LORA_RANK + KV_LORA_RANK:]      # (S, ROPE), half-split layout

    q_lat = dyt(q_lat, alpha_ref[1], q_w_ref[...], q_b_ref[...])
    q_proj = jnp.dot(q_lat, wqb_ref[...], preferred_element_type=f32) + bqb_ref[...]

    kv_lat = dyt(kv_lat, alpha_ref[2], kv_w_ref[...], kv_b_ref[...])
    kvb = jnp.dot(kv_lat, wkvb_ref[...], preferred_element_type=f32) + bkvb_ref[...]

    cos = cos_ref[...]
    sin = sin_ref[...]
    half = QK_ROPE_HEAD_DIM // 2

    def rope(z):  # z: (S, ROPE) in half-split (de-interleaved) layout
        z1 = z[:, :half]
        z2 = z[:, half:]
        return jnp.concatenate([z1 * cos - z2 * sin, z1 * sin + z2 * cos], axis=-1)

    k_pe = rope(k_pe_raw)                                   # shared across heads

    # causal mask generated in-kernel (no (S,S) DMA)
    row = lax.broadcasted_iota(jnp.int32, (S, S), 0)
    col = lax.broadcasted_iota(jnp.int32, (S, S), 1)
    causal = row >= col

    hd = QK_NOPE_HEAD_DIM + V_HEAD_DIM
    head_outs = []
    for hh in range(N_HEADS):                               # static unroll, tiny H
        qh = q_proj[:, hh * QK_HEAD_DIM:(hh + 1) * QK_HEAD_DIM]
        q_h = jnp.concatenate(
            [qh[:, :QK_NOPE_HEAD_DIM], rope(qh[:, QK_NOPE_HEAD_DIM:])], axis=-1)

        kvh = kvb[:, hh * hd:(hh + 1) * hd]
        k_h = jnp.concatenate([kvh[:, :QK_NOPE_HEAD_DIM], k_pe], axis=-1)
        v_h = kvh[:, QK_NOPE_HEAD_DIM:]

        # q @ k^T without an explicit transpose (contract last dims)
        s = lax.dot_general(q_h, k_h, (((1,), (1,)), ((), ())),
                            preferred_element_type=f32) * SOFTMAX_SCALE
        s = jnp.where(causal, s, -jnp.inf)
        s = s - jnp.max(s, axis=-1, keepdims=True)
        p = jnp.exp(s)
        p = p * pl.reciprocal(jnp.sum(p, axis=-1, keepdims=True), approx=True)
        head_outs.append(jnp.dot(p, v_h, preferred_element_type=f32))

    attn_out = jnp.concatenate(head_outs, axis=-1)          # (S, H*V) lane-contiguous
    attn_out = jnp.dot(attn_out, wo_ref[...], preferred_element_type=f32) + bo_ref[...]

    x1 = x + attn_out

    # ---- ffn branch (reference: x = ffn_norm(x); x = x + ffn(x)) ----
    y = dyt(x1, alpha_ref[3], ffn_w_ref[...], ffn_b_ref[...])
    h13 = jnp.dot(y, w13_ref[...], preferred_element_type=f32) + b13_ref[...]
    h1 = h13[:, :INTER_DIM]
    h3 = h13[:, INTER_DIM:]
    g = (h1 * jax.nn.sigmoid(h1)) * h3
    ffn = jnp.dot(g, w2_ref[...], preferred_element_type=f32) + b2_ref[...]

    o_ref[...] = (y + ffn).astype(o_ref.dtype)


# ----------------------------- wrapper -----------------------------
_WEIGHT_KEYS = (
    "attn_w", "attn_b", "q_w", "q_b", "kv_w", "kv_b", "ffn_w", "ffn_b",
    "wa", "ba", "wqb", "bqb", "wkvb", "bkvb", "wo", "bo",
    "w13", "b13", "w2", "b2", "cos", "sin",
)


def block_forward(x, prep):
    B, S, D = x.shape
    weights = [prep[k] for k in _WEIGHT_KEYS]

    def full_spec(a):
        nd = a.ndim
        return pl.BlockSpec(a.shape, lambda b, _n=nd: (0,) * _n)

    in_specs = [
        pl.BlockSpec((None, S, D), lambda b: (b, 0, 0)),            # x: per-batch slab
        pl.BlockSpec(memory_space=pltpu.MemorySpace.SMEM),          # DyT alphas
    ] + [full_spec(w) for w in weights]                             # resident weights

    return pl.pallas_call(
        _block_kernel,
        out_shape=jax.ShapeDtypeStruct((B, S, D), x.dtype),
        grid=(B,),
        in_specs=in_specs,
        out_specs=pl.BlockSpec((None, S, D), lambda b: (b, 0, 0)),
        compiler_params=pltpu.CompilerParams(
            dimension_semantics=("parallel",)),
    )(x, prep["alpha"], *weights)


# ----------------------------- host-side param prep -----------------------------
def precompute_rope(seqlen, dim, theta=ROPE_THETA):
    inv = 1.0 / (theta ** (jnp.arange(0, dim, 2, dtype=jnp.float32) / dim))
    t = jnp.arange(seqlen, dtype=jnp.float32)
    ang = jnp.outer(t, inv)                       # (S, dim/2)
    return jnp.cos(ang), jnp.sin(ang)


def prepare_params(params):
    """Fuse / permute weights so the kernel sees lane-friendly layouts.

    The rope columns of wkv_a and of each head block of wq_b are permuted from
    interleaved (re, im) pairs to a half-split layout ([re..., im...]).  Since
    the SAME permutation is applied to both q_pe and k_pe producers (and to the
    cos/sin tables), all q.k inner products — and hence the forward pass — are
    unchanged.
    """
    perm = jnp.concatenate([jnp.arange(0, QK_ROPE_HEAD_DIM, 2),
                            jnp.arange(1, QK_ROPE_HEAD_DIM, 2)])

    # fused A-projection: [wq_a | wkv_a(perm'd rope cols)]
    col_idx = jnp.concatenate([jnp.arange(KV_LORA_RANK), KV_LORA_RANK + perm])
    wkv_a_w = params["wkv_a"]["w"][:, col_idx]
    wkv_a_b = params["wkv_a"]["b"][:, col_idx]
    wa = jnp.concatenate([params["wq_a"]["w"], wkv_a_w], axis=1)
    ba = jnp.concatenate([params["wq_a"]["b"], wkv_a_b], axis=1)

    # permute pe columns within each head of wq_b
    head_idx = []
    for h in range(N_HEADS):
        base = h * QK_HEAD_DIM
        head_idx.append(base + jnp.arange(QK_NOPE_HEAD_DIM))
        head_idx.append(base + QK_NOPE_HEAD_DIM + perm)
    qb_idx = jnp.concatenate(head_idx)
    wqb = params["wq_b"]["w"][:, qb_idx]
    bqb = params["wq_b"]["b"][:, qb_idx]

    # fused MLP gate/up: [w1 | w3]
    w13 = jnp.concatenate([params["mlp"]["w1"]["w"], params["mlp"]["w3"]["w"]], axis=1)
    b13 = jnp.concatenate([params["mlp"]["w1"]["b"], params["mlp"]["w3"]["b"]], axis=1)

    cos, sin = precompute_rope(SEQ, QK_ROPE_HEAD_DIM)

    alpha = jnp.stack([
        params["attn_norm"]["alpha"], params["q_norm"]["alpha"],
        params["kv_norm"]["alpha"], params["ffn_norm"]["alpha"],
    ]).astype(jnp.float32)

    return {
        "alpha": alpha,
        "attn_w": params["attn_norm"]["weight"], "attn_b": params["attn_norm"]["bias"],
        "q_w": params["q_norm"]["weight"], "q_b": params["q_norm"]["bias"],
        "kv_w": params["kv_norm"]["weight"], "kv_b": params["kv_norm"]["bias"],
        "ffn_w": params["ffn_norm"]["weight"], "ffn_b": params["ffn_norm"]["bias"],
        "wa": wa, "ba": ba,
        "wqb": wqb, "bqb": bqb,
        "wkvb": params["wkv_b"]["w"], "bkvb": params["wkv_b"]["b"],
        "wo": params["wo"]["w"], "bo": params["wo"]["b"],
        "w13": w13, "b13": b13,
        "w2": params["mlp"]["w2"]["w"], "b2": params["mlp"]["w2"]["b"],
        "cos": cos, "sin": sin,
    }


# ----------------------------- deterministic params -----------------------------
def init_linear(key, din, dout):
    kw, kb = jax.random.split(key)
    bound = 1.0 / (din ** 0.5)
    return {
        "w": jax.random.uniform(kw, (din, dout), jnp.float32, -bound, bound),
        "b": jax.random.uniform(kb, (1, dout), jnp.float32, -bound, bound),
    }


def init_dyt(nf):
    return {
        "alpha": jnp.array(0.5, jnp.float32),
        "weight": jnp.ones((1, nf), jnp.float32),
        "bias": jnp.zeros((1, nf), jnp.float32),
    }


def init_params(key):
    keys = jax.random.split(key, 8)
    return {
        "attn_norm": init_dyt(DIM),
        "ffn_norm": init_dyt(DIM),
        "q_norm": init_dyt(Q_LORA_RANK),
        "kv_norm": init_dyt(KV_LORA_RANK),
        "wq_a": init_linear(keys[0], DIM, Q_LORA_RANK),
        "wq_b": init_linear(keys[1], Q_LORA_RANK, N_HEADS * QK_HEAD_DIM),
        "wkv_a": init_linear(keys[2], DIM, KV_LORA_RANK + QK_ROPE_HEAD_DIM),
        "wkv_b": init_linear(keys[3], KV_LORA_RANK,
                             N_HEADS * (QK_NOPE_HEAD_DIM + V_HEAD_DIM)),
        "wo": init_linear(keys[4], N_HEADS * V_HEAD_DIM, DIM),
        "mlp": {
            "w1": init_linear(keys[5], DIM, INTER_DIM),
            "w3": init_linear(keys[6], DIM, INTER_DIM),
            "w2": init_linear(keys[7], INTER_DIM, DIM),
        },
    }


# ----------------------------- main -----------------------------
if __name__ == "__main__":
    key = jax.random.PRNGKey(0)
    kx, kp = jax.random.split(key)

    x = jax.random.normal(kx, (BATCH, SEQ, DIM), jnp.float32)
    params = init_params(kp)
    prep = prepare_params(params)

    out = jax.jit(block_forward)(x, prep)
    out = jax.block_until_ready(out)

    assert out.shape == (BATCH, SEQ, DIM)
    assert bool(jnp.all(jnp.isfinite(out)))
    print("KERNEL_OK")
</pallas_src>

<mosaic_0001>
module attributes {stable_mosaic.version = 11 : i64} {
  func.func @_block_kernel(%arg0: i32, %arg1: memref<1x8x64xf32, #tpu.memory_space<vmem>>, %arg2: memref<4xf32, #tpu.memory_space<smem>>, %arg3: memref<1x64xf32, #tpu.memory_space<vmem>>, %arg4: memref<1x64xf32, #tpu.memory_space<vmem>>, %arg5: memref<1x32xf32, #tpu.memory_space<vmem>>, %arg6: memref<1x32xf32, #tpu.memory_space<vmem>>, %arg7: memref<1x32xf32, #tpu.memory_space<vmem>>, %arg8: memref<1x32xf32, #tpu.memory_space<vmem>>, %arg9: memref<1x64xf32, #tpu.memory_space<vmem>>, %arg10: memref<1x64xf32, #tpu.memory_space<vmem>>, %arg11: memref<64x80xf32, #tpu.memory_space<vmem>>, %arg12: memref<1x80xf32, #tpu.memory_space<vmem>>, %arg13: memref<32x96xf32, #tpu.memory_space<vmem>>, %arg14: memref<1x96xf32, #tpu.memory_space<vmem>>, %arg15: memref<32x128xf32, #tpu.memory_space<vmem>>, %arg16: memref<1x128xf32, #tpu.memory_space<vmem>>, %arg17: memref<64x64xf32, #tpu.memory_space<vmem>>, %arg18: memref<1x64xf32, #tpu.memory_space<vmem>>, %arg19: memref<64x256xf32, #tpu.memory_space<vmem>>, %arg20: memref<1x256xf32, #tpu.memory_space<vmem>>, %arg21: memref<128x64xf32, #tpu.memory_space<vmem>>, %arg22: memref<1x64xf32, #tpu.memory_space<vmem>>, %arg23: memref<8x8xf32, #tpu.memory_space<vmem>>, %arg24: memref<8x8xf32, #tpu.memory_space<vmem>>, %arg25: memref<1x8x64xf32, #tpu.memory_space<vmem>>) attributes {dimension_semantics = [#tpu.dimension_semantics<parallel>], iteration_bounds = array<i64: 2>, scalar_prefetch = 0 : i64, scratch_operands = 0 : i64, tpu.core_type = #tpu.core_type<tc>, window_params = [{transform_indices = @transform_0, window_bounds = array<i64: 1, 8, 64>}, {transform_indices = @transform_1, window_bounds = array<i64: 4>}, {pipeline_mode = #tpu.pipeline_mode<synchronous>, transform_indices = @transform_2, window_bounds = array<i64: 1, 64>}, {pipeline_mode = #tpu.pipeline_mode<synchronous>, transform_indices = @transform_3, window_bounds = array<i64: 1, 64>}, {pipeline_mode = #tpu.pipeline_mode<synchronous>, transform_indices = @transform_4, window_bounds = array<i64: 1, 32>}, {pipeline_mode = #tpu.pipeline_mode<synchronous>, transform_indices = @transform_5, window_bounds = array<i64: 1, 32>}, {pipeline_mode = #tpu.pipeline_mode<synchronous>, transform_indices = @transform_6, window_bounds = array<i64: 1, 32>}, {pipeline_mode = #tpu.pipeline_mode<synchronous>, transform_indices = @transform_7, window_bounds = array<i64: 1, 32>}, {pipeline_mode = #tpu.pipeline_mode<synchronous>, transform_indices = @transform_8, window_bounds = array<i64: 1, 64>}, {pipeline_mode = #tpu.pipeline_mode<synchronous>, transform_indices = @transform_9, window_bounds = array<i64: 1, 64>}, {pipeline_mode = #tpu.pipeline_mode<synchronous>, transform_indices = @transform_10, window_bounds = array<i64: 64, 80>}, {pipeline_mode = #tpu.pipeline_mode<synchronous>, transform_indices = @transform_11, window_bounds = array<i64: 1, 80>}, {pipeline_mode = #tpu.pipeline_mode<synchronous>, transform_indices = @transform_12, window_bounds = array<i64: 32, 96>}, {pipeline_mode = #tpu.pipeline_mode<synchronous>, transform_indices = @transform_13, window_bounds = array<i64: 1, 96>}, {pipeline_mode = #tpu.pipeline_mode<synchronous>, transform_indices = @transform_14, window_bounds = array<i64: 32, 128>}, {pipeline_mode = #tpu.pipeline_mode<synchronous>, transform_indices = @transform_15, window_bounds = array<i64: 1, 128>}, {pipeline_mode = #tpu.pipeline_mode<synchronous>, transform_indices = @transform_16, window_bounds = array<i64: 64, 64>}, {pipeline_mode = #tpu.pipeline_mode<synchronous>, transform_indices = @transform_17, window_bounds = array<i64: 1, 64>}, {pipeline_mode = #tpu.pipeline_mode<synchronous>, transform_indices = @transform_18, window_bounds = array<i64: 64, 256>}, {pipeline_mode = #tpu.pipeline_mode<synchronous>, transform_indices = @transform_19, window_bounds = array<i64: 1, 256>}, {pipeline_mode = #tpu.pipeline_mode<synchronous>, transform_indices = @transform_20, window_bounds = array<i64: 128, 64>}, {pipeline_mode = #tpu.pipeline_mode<synchronous>, transform_indices = @transform_21, window_bounds = array<i64: 1, 64>}, {pipeline_mode = #tpu.pipeline_mode<synchronous>, transform_indices = @transform_22, window_bounds = array<i64: 8, 8>}, {pipeline_mode = #tpu.pipeline_mode<synchronous>, transform_indices = @transform_23, window_bounds = array<i64: 8, 8>}, {transform_indices = @transform_24, window_bounds = array<i64: 1, 8, 64>}]} {
    %c0 = arith.constant 0 : index
    %c0_0 = arith.constant 0 : index
    %c0_1 = arith.constant 0 : index
    %0 = vector.load %arg1[%c0, %c0_0, %c0_1] : memref<1x8x64xf32, #tpu.memory_space<vmem>>, vector<1x8x64xf32>
    %1 = vector.shape_cast %0 : vector<1x8x64xf32> to vector<8x64xf32>
    %c0_2 = arith.constant 0 : index
    %2 = memref.load %arg2[%c0_2] : memref<4xf32, #tpu.memory_space<smem>>
    %c0_3 = arith.constant 0 : index
    %c0_4 = arith.constant 0 : index
    %3 = vector.load %arg3[%c0_3, %c0_4] : memref<1x64xf32, #tpu.memory_space<vmem>>, vector<1x64xf32>
    %c0_5 = arith.constant 0 : index
    %c0_6 = arith.constant 0 : index
    %4 = vector.load %arg4[%c0_5, %c0_6] : memref<1x64xf32, #tpu.memory_space<vmem>>, vector<1x64xf32>
    %5 = vector.broadcast %2 : f32 to vector<8x64xf32>
    %6 = arith.mulf %5, %1 : vector<8x64xf32>
    %7 = math.tanh %6 : vector<8x64xf32>
    %8 = vector.broadcast %3 : vector<1x64xf32> to vector<8x64xf32>
    %9 = arith.mulf %8, %7 : vector<8x64xf32>
    %10 = vector.broadcast %4 : vector<1x64xf32> to vector<8x64xf32>
    %11 = arith.addf %9, %10 : vector<8x64xf32>
    %c0_7 = arith.constant 0 : index
    %c0_8 = arith.constant 0 : index
    %12 = vector.load %arg11[%c0_7, %c0_8] : memref<64x80xf32, #tpu.memory_space<vmem>>, vector<64x80xf32>
    %cst = arith.constant dense<0.000000e+00> : vector<8x80xf32>
    %13 = tpu.matmul %11, %12, %cst {dimension_numbers = #tpu.dot_dimension_numbers<[1], [0], [0], [1], [0, 0, 1, 1], [], []>} : vector<8x64xf32>, vector<64x80xf32>, vector<8x80xf32> -> vector<8x80xf32>
    %c0_9 = arith.constant 0 : index
    %c0_10 = arith.constant 0 : index
    %14 = vector.load %arg12[%c0_9, %c0_10] : memref<1x80xf32, #tpu.memory_space<vmem>>, vector<1x80xf32>
    %15 = vector.broadcast %14 : vector<1x80xf32> to vector<8x80xf32>
    %16 = arith.addf %13, %15 : vector<8x80xf32>
    %17 = vector.extract_strided_slice %16 {offsets = [0, 0], sizes = [8, 32], strides = [1, 1]} : vector<8x80xf32> to vector<8x32xf32>
    %18 = vector.extract_strided_slice %16 {offsets = [0, 32], sizes = [8, 32], strides = [1, 1]} : vector<8x80xf32> to vector<8x32xf32>
    %19 = vector.extract_strided_slice %16 {offsets = [0, 64], sizes = [8, 16], strides = [1, 1]} : vector<8x80xf32> to vector<8x16xf32>
    %c1 = arith.constant 1 : index
    %20 = memref.load %arg2[%c1] : memref<4xf32, #tpu.memory_space<smem>>
    %c0_11 = arith.constant 0 : index
    %c0_12 = arith.constant 0 : index
    %21 = vector.load %arg5[%c0_11, %c0_12] : memref<1x32xf32, #tpu.memory_space<vmem>>, vector<1x32xf32>
    %c0_13 = arith.constant 0 : index
    %c0_14 = arith.constant 0 : index
    %22 = vector.load %arg6[%c0_13, %c0_14] : memref<1x32xf32, #tpu.memory_space<vmem>>, vector<1x32xf32>
    %23 = vector.broadcast %20 : f32 to vector<8x32xf32>
    %24 = arith.mulf %23, %17 : vector<8x32xf32>
    %25 = math.tanh %24 : vector<8x32xf32>
    %26 = vector.broadcast %21 : vector<1x32xf32> to vector<8x32xf32>
    %27 = arith.mulf %26, %25 : vector<8x32xf32>
    %28 = vector.broadcast %22 : vector<1x32xf32> to vector<8x32xf32>
    %29 = arith.addf %27, %28 : vector<8x32xf32>
    %c0_15 = arith.constant 0 : index
    %c0_16 = arith.constant 0 : index
    %30 = vector.load %arg13[%c0_15, %c0_16] : memref<32x96xf32, #tpu.memory_space<vmem>>, vector<32x96xf32>
    %cst_17 = arith.constant dense<0.000000e+00> : vector<8x96xf32>
    %31 = tpu.matmul %29, %30, %cst_17 {dimension_numbers = #tpu.dot_dimension_numbers<[1], [0], [0], [1], [0, 0, 1, 1], [], []>} : vector<8x32xf32>, vector<32x96xf32>, vector<8x96xf32> -> vector<8x96xf32>
    %c0_18 = arith.constant 0 : index
    %c0_19 = arith.constant 0 : index
    %32 = vector.load %arg14[%c0_18, %c0_19] : memref<1x96xf32, #tpu.memory_space<vmem>>, vector<1x96xf32>
    %33 = vector.broadcast %32 : vector<1x96xf32> to vector<8x96xf32>
    %34 = arith.addf %31, %33 : vector<8x96xf32>
    %c2 = arith.constant 2 : index
    %35 = memref.load %arg2[%c2] : memref<4xf32, #tpu.memory_space<smem>>
    %c0_20 = arith.constant 0 : index
    %c0_21 = arith.constant 0 : index
    %36 = vector.load %arg7[%c0_20, %c0_21] : memref<1x32xf32, #tpu.memory_space<vmem>>, vector<1x32xf32>
    %c0_22 = arith.constant 0 : index
    %c0_23 = arith.constant 0 : index
    %37 = vector.load %arg8[%c0_22, %c0_23] : memref<1x32xf32, #tpu.memory_space<vmem>>, vector<1x32xf32>
    %38 = vector.broadcast %35 : f32 to vector<8x32xf32>
    %39 = arith.mulf %38, %18 : vector<8x32xf32>
    %40 = math.tanh %39 : vector<8x32xf32>
    %41 = vector.broadcast %36 : vector<1x32xf32> to vector<8x32xf32>
    %42 = arith.mulf %41, %40 : vector<8x32xf32>
    %43 = vector.broadcast %37 : vector<1x32xf32> to vector<8x32xf32>
    %44 = arith.addf %42, %43 : vector<8x32xf32>
    %c0_24 = arith.constant 0 : index
    %c0_25 = arith.constant 0 : index
    %45 = vector.load %arg15[%c0_24, %c0_25] : memref<32x128xf32, #tpu.memory_space<vmem>>, vector<32x128xf32>
    %cst_26 = arith.constant dense<0.000000e+00> : vector<8x128xf32>
    %46 = tpu.matmul %44, %45, %cst_26 {dimension_numbers = #tpu.dot_dimension_numbers<[1], [0], [0], [1], [0, 0, 1, 1], [], []>} : vector<8x32xf32>, vector<32x128xf32>, vector<8x128xf32> -> vector<8x128xf32>
    %c0_27 = arith.constant 0 : index
    %c0_28 = arith.constant 0 : index
    %47 = vector.load %arg16[%c0_27, %c0_28] : memref<1x128xf32, #tpu.memory_space<vmem>>, vector<1x128xf32>
    %48 = vector.broadcast %47 : vector<1x128xf32> to vector<8x128xf32>
    %49 = arith.addf %46, %48 : vector<8x128xf32>
    %c0_29 = arith.constant 0 : index
    %c0_30 = arith.constant 0 : index
    %50 = vector.load %arg23[%c0_29, %c0_30] : memref<8x8xf32, #tpu.memory_space<vmem>>, vector<8x8xf32>
    %c0_31 = arith.constant 0 : index
    %c0_32 = arith.constant 0 : index
    %51 = vector.load %arg24[%c0_31, %c0_32] : memref<8x8xf32, #tpu.memory_space<vmem>>, vector<8x8xf32>
    %52 = vector.extract_strided_slice %19 {offsets = [0, 0], sizes = [8, 8], strides = [1, 1]} : vector<8x16xf32> to vector<8x8xf32>
    %53 = vector.extract_strided_slice %19 {offsets = [0, 8], sizes = [8, 8], strides = [1, 1]} : vector<8x16xf32> to vector<8x8xf32>
    %54 = arith.mulf %52, %50 : vector<8x8xf32>
    %55 = arith.mulf %53, %51 : vector<8x8xf32>
    %56 = arith.subf %54, %55 : vector<8x8xf32>
    %57 = arith.mulf %52, %51 : vector<8x8xf32>
    %58 = arith.mulf %53, %50 : vector<8x8xf32>
    %59 = arith.addf %57, %58 : vector<8x8xf32>
    %60 = tpu.concatenate %56, %59 in 1 : vector<8x8xf32>, vector<8x8xf32> -> vector<8x16xf32>
    %61 = tpu.iota {dimensions = array<i32: 0>} : vector<8x8xi32>
    %62 = tpu.iota {dimensions = array<i32: 1>} : vector<8x8xi32>
    %63 = arith.cmpi sge, %61, %62 : vector<8x8xi32>
    %64 = vector.extract_strided_slice %34 {offsets = [0, 0], sizes = [8, 48], strides = [1, 1]} : vector<8x96xf32> to vector<8x48xf32>
    %65 = vector.extract_strided_slice %64 {offsets = [0, 0], sizes = [8, 32], strides = [1, 1]} : vector<8x48xf32> to vector<8x32xf32>
    %66 = vector.extract_strided_slice %64 {offsets = [0, 32], sizes = [8, 16], strides = [1, 1]} : vector<8x48xf32> to vector<8x16xf32>
    %67 = vector.extract_strided_slice %66 {offsets = [0, 0], sizes = [8, 8], strides = [1, 1]} : vector<8x16xf32> to vector<8x8xf32>
    %68 = vector.extract_strided_slice %66 {offsets = [0, 8], sizes = [8, 8], strides = [1, 1]} : vector<8x16xf32> to vector<8x8xf32>
    %69 = arith.mulf %67, %50 : vector<8x8xf32>
    %70 = arith.mulf %68, %51 : vector<8x8xf32>
    %71 = arith.subf %69, %70 : vector<8x8xf32>
    %72 = arith.mulf %67, %51 : vector<8x8xf32>
    %73 = arith.mulf %68, %50 : vector<8x8xf32>
    %74 = arith.addf %72, %73 : vector<8x8xf32>
    %75 = tpu.concatenate %71, %74 in 1 : vector<8x8xf32>, vector<8x8xf32> -> vector<8x16xf32>
    %76 = tpu.concatenate %65, %75 in 1 : vector<8x32xf32>, vector<8x16xf32> -> vector<8x48xf32>
    %77 = vector.extract_strided_slice %49 {offsets = [0, 0], sizes = [8, 64], strides = [1, 1]} : vector<8x128xf32> to vector<8x64xf32>
    %78 = vector.extract_strided_slice %77 {offsets = [0, 0], sizes = [8, 32], strides = [1, 1]} : vector<8x64xf32> to vector<8x32xf32>
    %79 = tpu.concatenate %78, %60 in 1 : vector<8x32xf32>, vector<8x16xf32> -> vector<8x48xf32>
    %80 = vector.extract_strided_slice %77 {offsets = [0, 32], sizes = [8, 32], strides = [1, 1]} : vector<8x64xf32> to vector<8x32xf32>
    %cst_33 = arith.constant dense<0.000000e+00> : vector<8x8xf32>
    %81 = tpu.matmul %76, %79, %cst_33 {dimension_numbers = #tpu.dot_dimension_numbers<[1], [1], [0], [0], [0, 0, 1, 0], [], []>} : vector<8x48xf32>, vector<8x48xf32>, vector<8x8xf32> -> vector<8x8xf32>
    %cst_34 = arith.constant 0.144337565 : f32
    %82 = vector.broadcast %cst_34 : f32 to vector<8x8xf32>
    %83 = arith.mulf %81, %82 : vector<8x8xf32>
    %cst_35 = arith.constant 0xFF800000 : f32
    %84 = vector.broadcast %cst_35 : f32 to vector<8x8xf32>
    %85 = arith.select %63, %83, %84 : vector<8x8xi1>, vector<8x8xf32>
    %cst_36 = arith.constant dense<0xFF800000> : vector<8xf32>
    %86 = vector.multi_reduction <maximumf>, %85, %cst_36 [1] : vector<8x8xf32> to vector<8xf32>
    %87 = vector.shape_cast %86 : vector<8xf32> to vector<8x1xf32>
    %88 = vector.broadcast %87 : vector<8x1xf32> to vector<8x8xf32>
    %89 = arith.subf %85, %88 : vector<8x8xf32>
    %90 = math.exp %89 : vector<8x8xf32>
    %cst_37 = arith.constant dense<0.000000e+00> : vector<8xf32>
    %91 = vector.multi_reduction <add>, %90, %cst_37 [1] : vector<8x8xf32> to vector<8xf32>
    %92 = vector.shape_cast %91 : vector<8xf32> to vector<8x1xf32>
    %93 = tpu.reciprocal %92 {approx = true} : vector<8x1xf32> -> vector<8x1xf32>
    %94 = vector.broadcast %93 : vector<8x1xf32> to vector<8x8xf32>
    %95 = arith.mulf %90, %94 : vector<8x8xf32>
    %cst_38 = arith.constant dense<0.000000e+00> : vector<8x32xf32>
    %96 = tpu.matmul %95, %80, %cst_38 {dimension_numbers = #tpu.dot_dimension_numbers<[1], [0], [0], [1], [0, 0, 1, 1], [], []>} : vector<8x8xf32>, vector<8x32xf32>, vector<8x32xf32> -> vector<8x32xf32>
    %97 = vector.extract_strided_slice %34 {offsets = [0, 48], sizes = [8, 48], strides = [1, 1]} : vector<8x96xf32> to vector<8x48xf32>
    %98 = vector.extract_strided_slice %97 {offsets = [0, 0], sizes = [8, 32], strides = [1, 1]} : vector<8x48xf32> to vector<8x32xf32>
    %99 = vector.extract_strided_slice %97 {offsets = [0, 32], sizes = [8, 16], strides = [1, 1]} : vector<8x48xf32> to vector<8x16xf32>
    %100 = vector.extract_strided_slice %99 {offsets = [0, 0], sizes = [8, 8], strides = [1, 1]} : vector<8x16xf32> to vector<8x8xf32>
    %101 = vector.extract_strided_slice %99 {offsets = [0, 8], sizes = [8, 8], strides = [1, 1]} : vector<8x16xf32> to vector<8x8xf32>
    %102 = arith.mulf %100, %50 : vector<8x8xf32>
    %103 = arith.mulf %101, %51 : vector<8x8xf32>
    %104 = arith.subf %102, %103 : vector<8x8xf32>
    %105 = arith.mulf %100, %51 : vector<8x8xf32>
    %106 = arith.mulf %101, %50 : vector<8x8xf32>
    %107 = arith.addf %105, %106 : vector<8x8xf32>
    %108 = tpu.concatenate %104, %107 in 1 : vector<8x8xf32>, vector<8x8xf32> -> vector<8x16xf32>
    %109 = tpu.concatenate %98, %108 in 1 : vector<8x32xf32>, vector<8x16xf32> -> vector<8x48xf32>
    %110 = vector.extract_strided_slice %49 {offsets = [0, 64], sizes = [8, 64], strides = [1, 1]} : vector<8x128xf32> to vector<8x64xf32>
    %111 = vector.extract_strided_slice %110 {offsets = [0, 0], sizes = [8, 32], strides = [1, 1]} : vector<8x64xf32> to vector<8x32xf32>
    %112 = tpu.concatenate %111, %60 in 1 : vector<8x32xf32>, vector<8x16xf32> -> vector<8x48xf32>
    %113 = vector.extract_strided_slice %110 {offsets = [0, 32], sizes = [8, 32], strides = [1, 1]} : vector<8x64xf32> to vector<8x32xf32>
    %cst_39 = arith.constant dense<0.000000e+00> : vector<8x8xf32>
    %114 = tpu.matmul %109, %112, %cst_39 {dimension_numbers = #tpu.dot_dimension_numbers<[1], [1], [0], [0], [0, 0, 1, 0], [], []>} : vector<8x48xf32>, vector<8x48xf32>, vector<8x8xf32> -> vector<8x8xf32>
    %cst_40 = arith.constant 0.144337565 : f32
    %115 = vector.broadcast %cst_40 : f32 to vector<8x8xf32>
    %116 = arith.mulf %114, %115 : vector<8x8xf32>
    %cst_41 = arith.constant 0xFF800000 : f32
    %117 = vector.broadcast %cst_41 : f32 to vector<8x8xf32>
    %118 = arith.select %63, %116, %117 : vector<8x8xi1>, vector<8x8xf32>
    %cst_42 = arith.constant dense<0xFF800000> : vector<8xf32>
    %119 = vector.multi_reduction <maximumf>, %118, %cst_42 [1] : vector<8x8xf32> to vector<8xf32>
    %120 = vector.shape_cast %119 : vector<8xf32> to vector<8x1xf32>
    %121 = vector.broadcast %120 : vector<8x1xf32> to vector<8x8xf32>
    %122 = arith.subf %118, %121 : vector<8x8xf32>
    %123 = math.exp %122 : vector<8x8xf32>
    %cst_43 = arith.constant dense<0.000000e+00> : vector<8xf32>
    %124 = vector.multi_reduction <add>, %123, %cst_43 [1] : vector<8x8xf32> to vector<8xf32>
    %125 = vector.shape_cast %124 : vector<8xf32> to vector<8x1xf32>
    %126 = tpu.reciprocal %125 {approx = true} : vector<8x1xf32> -> vector<8x1xf32>
    %127 = vector.broadcast %126 : vector<8x1xf32> to vector<8x8xf32>
    %128 = arith.mulf %123, %127 : vector<8x8xf32>
    %cst_44 = arith.constant dense<0.000000e+00> : vector<8x32xf32>
    %129 = tpu.matmul %128, %113, %cst_44 {dimension_numbers = #tpu.dot_dimension_numbers<[1], [0], [0], [1], [0, 0, 1, 1], [], []>} : vector<8x8xf32>, vector<8x32xf32>, vector<8x32xf32> -> vector<8x32xf32>
    %130 = tpu.concatenate %96, %129 in 1 : vector<8x32xf32>, vector<8x32xf32> -> vector<8x64xf32>
    %c0_45 = arith.constant 0 : index
    %c0_46 = arith.constant 0 : index
    %131 = vector.load %arg17[%c0_45, %c0_46] : memref<64x64xf32, #tpu.memory_space<vmem>>, vector<64x64xf32>
    %cst_47 = arith.constant dense<0.000000e+00> : vector<8x64xf32>
    %132 = tpu.matmul %130, %131, %cst_47 {dimension_numbers = #tpu.dot_dimension_numbers<[1], [0], [0], [1], [0, 0, 1, 1], [], []>} : vector<8x64xf32>, vector<64x64xf32>, vector<8x64xf32> -> vector<8x64xf32>
    %c0_48 = arith.constant 0 : index
    %c0_49 = arith.constant 0 : index
    %133 = vector.load %arg18[%c0_48, %c0_49] : memref<1x64xf32, #tpu.memory_space<vmem>>, vector<1x64xf32>
    %134 = vector.broadcast %133 : vector<1x64xf32> to vector<8x64xf32>
    %135 = arith.addf %132, %134 : vector<8x64xf32>
    %136 = arith.addf %1, %135 : vector<8x64xf32>
    %c3 = arith.constant 3 : index
    %137 = memref.load %arg2[%c3] : memref<4xf32, #tpu.memory_space<smem>>
    %c0_50 = arith.constant 0 : index
    %c0_51 = arith.constant 0 : index
    %138 = vector.load %arg9[%c0_50, %c0_51] : memref<1x64xf32, #tpu.memory_space<vmem>>, vector<1x64xf32>
    %c0_52 = arith.constant 0 : index
    %c0_53 = arith.constant 0 : index
    %139 = vector.load %arg10[%c0_52, %c0_53] : memref<1x64xf32, #tpu.memory_space<vmem>>, vector<1x64xf32>
    %140 = vector.broadcast %137 : f32 to vector<8x64xf32>
    %141 = arith.mulf %140, %136 : vector<8x64xf32>
    %142 = math.tanh %141 : vector<8x64xf32>
    %143 = vector.broadcast %138 : vector<1x64xf32> to vector<8x64xf32>
    %144 = arith.mulf %143, %142 : vector<8x64xf32>
    %145 = vector.broadcast %139 : vector<1x64xf32> to vector<8x64xf32>
    %146 = arith.addf %144, %145 : vector<8x64xf32>
    %c0_54 = arith.constant 0 : index
    %c0_55 = arith.constant 0 : index
    %147 = vector.load %arg19[%c0_54, %c0_55] : memref<64x256xf32, #tpu.memory_space<vmem>>, vector<64x256xf32>
    %cst_56 = arith.constant dense<0.000000e+00> : vector<8x256xf32>
    %148 = tpu.matmul %146, %147, %cst_56 {dimension_numbers = #tpu.dot_dimension_numbers<[1], [0], [0], [1], [0, 0, 1, 1], [], []>} : vector<8x64xf32>, vector<64x256xf32>, vector<8x256xf32> -> vector<8x256xf32>
    %c0_57 = arith.constant 0 : index
    %c0_58 = arith.constant 0 : index
    %149 = vector.load %arg20[%c0_57, %c0_58] : memref<1x256xf32, #tpu.memory_space<vmem>>, vector<1x256xf32>
    %150 = vector.broadcast %149 : vector<1x256xf32> to vector<8x256xf32>
    %151 = arith.addf %148, %150 : vector<8x256xf32>
    %152 = vector.extract_strided_slice %151 {offsets = [0, 0], sizes = [8, 128], strides = [1, 1]} : vector<8x256xf32> to vector<8x128xf32>
    %153 = vector.extract_strided_slice %151 {offsets = [0, 128], sizes = [8, 128], strides = [1, 1]} : vector<8x256xf32> to vector<8x128xf32>
    %154 = arith.negf %152 : vector<8x128xf32>
    %155 = math.exp %154 : vector<8x128xf32>
    %cst_59 = arith.constant 1.000000e+00 : f32
    %156 = vector.broadcast %cst_59 : f32 to vector<8x128xf32>
    %157 = arith.addf %156, %155 : vector<8x128xf32>
    %158 = arith.divf %156, %157 : vector<8x128xf32>
    %159 = arith.mulf %152, %158 : vector<8x128xf32>
    %160 = arith.mulf %159, %153 : vector<8x128xf32>
    %c0_60 = arith.constant 0 : index
    %c0_61 = arith.constant 0 : index
    %161 = vector.load %arg21[%c0_60, %c0_61] : memref<128x64xf32, #tpu.memory_space<vmem>>, vector<128x64xf32>
    %cst_62 = arith.constant dense<0.000000e+00> : vector<8x64xf32>
    %162 = tpu.matmul %160, %161, %cst_62 {dimension_numbers = #tpu.dot_dimension_numbers<[1], [0], [0], [1], [0, 0, 1, 1], [], []>} : vector<8x128xf32>, vector<128x64xf32>, vector<8x64xf32> -> vector<8x64xf32>
    %c0_63 = arith.constant 0 : index
    %c0_64 = arith.constant 0 : index
    %163 = vector.load %arg22[%c0_63, %c0_64] : memref<1x64xf32, #tpu.memory_space<vmem>>, vector<1x64xf32>
    %164 = vector.broadcast %163 : vector<1x64xf32> to vector<8x64xf32>
    %165 = arith.addf %162, %164 : vector<8x64xf32>
    %166 = arith.addf %146, %165 : vector<8x64xf32>
    %c0_65 = arith.constant 0 : index
    %c0_66 = arith.constant 0 : index
    %c0_67 = arith.constant 0 : index
    %167 = vector.load %arg25[%c0_65, %c0_66, %c0_67] : memref<1x8x64xf32, #tpu.memory_space<vmem>>, vector<1x8x64xf32>
    %168 = vector.shape_cast %167 : vector<1x8x64xf32> to vector<8x64xf32>
    %169 = vector.shape_cast %166 : vector<8x64xf32> to vector<1x8x64xf32>
    tpu.vector_store %arg25[%c0_65, %c0_66, %c0_67], %169 {strides = array<i32>} : memref<1x8x64xf32, #tpu.memory_space<vmem>>, vector<1x8x64xf32>,
    return
  }
  func.func @transform_0(%arg0: i32) -> (i32, i32, i32) {
    %c0_i32 = arith.constant 0 : i32
    %c0_i32_0 = arith.constant 0 : i32
    %c0_i32_1 = arith.constant 0 : i32
    return %arg0, %c0_i32, %c0_i32_0 : i32, i32, i32
  }
  func.func @transform_1(%arg0: i32) -> i32 {
    %c0_i32 = arith.constant 0 : i32
    %c0_i32_0 = arith.constant 0 : i32
    return %c0_i32 : i32
  }
  func.func @transform_2(%arg0: i32) -> (i32, i32) {
    %c0_i32 = arith.constant 0 : i32
    %c0_i32_0 = arith.constant 0 : i32
    %c0_i32_1 = arith.constant 0 : i32
    return %c0_i32, %c0_i32_0 : i32, i32
  }
  func.func @transform_3(%arg0: i32) -> (i32, i32) {
    %c0_i32 = arith.constant 0 : i32
    %c0_i32_0 = arith.constant 0 : i32
    %c0_i32_1 = arith.constant 0 : i32
    return %c0_i32, %c0_i32_0 : i32, i32
  }
  func.func @transform_4(%arg0: i32) -> (i32, i32) {
    %c0_i32 = arith.constant 0 : i32
    %c0_i32_0 = arith.constant 0 : i32
    %c0_i32_1 = arith.constant 0 : i32
    return %c0_i32, %c0_i32_0 : i32, i32
  }
  func.func @transform_5(%arg0: i32) -> (i32, i32) {
    %c0_i32 = arith.constant 0 : i32
    %c0_i32_0 = arith.constant 0 : i32
    %c0_i32_1 = arith.constant 0 : i32
    return %c0_i32, %c0_i32_0 : i32, i32
  }
  func.func @transform_6(%arg0: i32) -> (i32, i32) {
    %c0_i32 = arith.constant 0 : i32
    %c0_i32_0 = arith.constant 0 : i32
    %c0_i32_1 = arith.constant 0 : i32
    return %c0_i32, %c0_i32_0 : i32, i32
  }
  func.func @transform_7(%arg0: i32) -> (i32, i32) {
    %c0_i32 = arith.constant 0 : i32
    %c0_i32_0 = arith.constant 0 : i32
    %c0_i32_1 = arith.constant 0 : i32
    return %c0_i32, %c0_i32_0 : i32, i32
  }
  func.func @transform_8(%arg0: i32) -> (i32, i32) {
    %c0_i32 = arith.constant 0 : i32
    %c0_i32_0 = arith.constant 0 : i32
    %c0_i32_1 = arith.constant 0 : i32
    return %c0_i32, %c0_i32_0 : i32, i32
  }
  func.func @transform_9(%arg0: i32) -> (i32, i32) {
    %c0_i32 = arith.constant 0 : i32
    %c0_i32_0 = arith.constant 0 : i32
    %c0_i32_1 = arith.constant 0 : i32
    return %c0_i32, %c0_i32_0 : i32, i32
  }
  func.func @transform_10(%arg0: i32) -> (i32, i32) {
    %c0_i32 = arith.constant 0 : i32
    %c0_i32_0 = arith.constant 0 : i32
    %c0_i32_1 = arith.constant 0 : i32
    return %c0_i32, %c0_i32_0 : i32, i32
  }
  func.func @transform_11(%arg0: i32) -> (i32, i32) {
    %c0_i32 = arith.constant 0 : i32
    %c0_i32_0 = arith.constant 0 : i32
    %c0_i32_1 = arith.constant 0 : i32
    return %c0_i32, %c0_i32_0 : i32, i32
  }
  func.func @transform_12(%arg0: i32) -> (i32, i32) {
    %c0_i32 = arith.constant 0 : i32
    %c0_i32_0 = arith.constant 0 : i32
    %c0_i32_1 = arith.constant 0 : i32
    return %c0_i32, %c0_i32_0 : i32, i32
  }
  func.func @transform_13(%arg0: i32) -> (i32, i32) {
    %c0_i32 = arith.constant 0 : i32
    %c0_i32_0 = arith.constant 0 : i32
    %c0_i32_1 = arith.constant 0 : i32
    return %c0_i32, %c0_i32_0 : i32, i32
  }
  func.func @transform_14(%arg0: i32) -> (i32, i32) {
    %c0_i32 = arith.constant 0 : i32
    %c0_i32_0 = arith.constant 0 : i32
    %c0_i32_1 = arith.constant 0 : i32
    return %c0_i32, %c0_i32_0 : i32, i32
  }
  func.func @transform_15(%arg0: i32) -> (i32, i32) {
    %c0_i32 = arith.constant 0 : i32
    %c0_i32_0 = arith.constant 0 : i32
    %c0_i32_1 = arith.constant 0 : i32
    return %c0_i32, %c0_i32_0 : i32, i32
  }
  func.func @transform_16(%arg0: i32) -> (i32, i32) {
    %c0_i32 = arith.constant 0 : i32
    %c0_i32_0 = arith.constant 0 : i32
    %c0_i32_1 = arith.constant 0 : i32
    return %c0_i32, %c0_i32_0 : i32, i32
  }
  func.func @transform_17(%arg0: i32) -> (i32, i32) {
    %c0_i32 = arith.constant 0 : i32
    %c0_i32_0 = arith.constant 0 : i32
    %c0_i32_1 = arith.constant 0 : i32
    return %c0_i32, %c0_i32_0 : i32, i32
  }
  func.func @transform_18(%arg0: i32) -> (i32, i32) {
    %c0_i32 = arith.constant 0 : i32
    %c0_i32_0 = arith.constant 0 : i32
    %c0_i32_1 = arith.constant 0 : i32
    return %c0_i32, %c0_i32_0 : i32, i32
  }
  func.func @transform_19(%arg0: i32) -> (i32, i32) {
    %c0_i32 = arith.constant 0 : i32
    %c0_i32_0 = arith.constant 0 : i32
    %c0_i32_1 = arith.constant 0 : i32
    return %c0_i32, %c0_i32_0 : i32, i32
  }
  func.func @transform_20(%arg0: i32) -> (i32, i32) {
    %c0_i32 = arith.constant 0 : i32
    %c0_i32_0 = arith.constant 0 : i32
    %c0_i32_1 = arith.constant 0 : i32
    return %c0_i32, %c0_i32_0 : i32, i32
  }
  func.func @transform_21(%arg0: i32) -> (i32, i32) {
    %c0_i32 = arith.constant 0 : i32
    %c0_i32_0 = arith.constant 0 : i32
    %c0_i32_1 = arith.constant 0 : i32
    return %c0_i32, %c0_i32_0 : i32, i32
  }
  func.func @transform_22(%arg0: i32) -> (i32, i32) {
    %c0_i32 = arith.constant 0 : i32
    %c0_i32_0 = arith.constant 0 : i32
    %c0_i32_1 = arith.constant 0 : i32
    return %c0_i32, %c0_i32_0 : i32, i32
  }
  func.func @transform_23(%arg0: i32) -> (i32, i32) {
    %c0_i32 = arith.constant 0 : i32
    %c0_i32_0 = arith.constant 0 : i32
    %c0_i32_1 = arith.constant 0 : i32
    return %c0_i32, %c0_i32_0 : i32, i32
  }
  func.func @transform_24(%arg0: i32) -> (i32, i32, i32) {
    %c0_i32 = arith.constant 0 : i32
    %c0_i32_0 = arith.constant 0 : i32
    %c0_i32_1 = arith.constant 0 : i32
    return %arg0, %c0_i32, %c0_i32_0 : i32, i32, i32
  }
}

</mosaic_0001>

<llo_original>
// kernel: block_forward.1
$region0: #{block_forward.1}
  #allocation0 [shape = 'u32[]', space=smem, size = 0x4, offset = 0x4, fixed_abs, tag = 'smem constant byte address 0x4 - core index']
  #allocation1 [shape = 'u32[144,128]{1,0:T(1,128)}', space=vmem, size = 0x12000, scoped, tag = 'internal scratch']
  %s0 = inlined_call_operand.hbm [shape: f32[2,8,64], index: 0, kind: input, shape index: {}]
  %s1 = inlined_call_operand.vmem [shape: f32[4], index: 1, kind: input, shape index: {}]
  %s2 = inlined_call_operand.vmem [shape: f32[1,64], index: 2, kind: input, shape index: {}]
  %s3 = inlined_call_operand.vmem [shape: f32[1,64], index: 3, kind: input, shape index: {}]
  %s4 = inlined_call_operand.vmem [shape: f32[1,32], index: 4, kind: input, shape index: {}]
  %s5 = inlined_call_operand.vmem [shape: f32[1,32], index: 5, kind: input, shape index: {}]
  %s6 = inlined_call_operand.hbm [shape: f32[1,32], index: 6, kind: input, shape index: {}]
  %s7 = inlined_call_operand.hbm [shape: f32[1,32], index: 7, kind: input, shape index: {}]
  %s8 = inlined_call_operand.hbm [shape: f32[1,64], index: 8, kind: input, shape index: {}]
  %s9 = inlined_call_operand.hbm [shape: f32[1,64], index: 9, kind: input, shape index: {}]
  %s10 = inlined_call_operand.vmem [shape: f32[64,80], index: 10, kind: input, shape index: {}]
  %s11 = inlined_call_operand.hbm [shape: f32[1,80], index: 11, kind: input, shape index: {}]
  %s12 = inlined_call_operand.hbm [shape: f32[32,96], index: 12, kind: input, shape index: {}]
  %s13 = inlined_call_operand.hbm [shape: f32[1,96], index: 13, kind: input, shape index: {}]
  %s14 = inlined_call_operand.hbm [shape: f32[32,128], index: 14, kind: input, shape index: {}]
  %s15 = inlined_call_operand.hbm [shape: f32[1,128], index: 15, kind: input, shape index: {}]
  %s16 = inlined_call_operand.hbm [shape: f32[64,64], index: 16, kind: input, shape index: {}]
  %s17 = inlined_call_operand.hbm [shape: f32[1,64], index: 17, kind: input, shape index: {}]
  %s18 = inlined_call_operand.vmem [shape: f32[64,256], index: 18, kind: input, shape index: {}]
  %s19 = inlined_call_operand.vmem [shape: f32[1,256], index: 19, kind: input, shape index: {}]
  %s20 = inlined_call_operand.vmem [shape: f32[128,64], index: 20, kind: input, shape index: {}]
  %s21 = inlined_call_operand.hbm [shape: f32[1,64], index: 21, kind: input, shape index: {}]
  %s22 = inlined_call_operand.hbm [shape: f32[8,8], index: 22, kind: input, shape index: {}]
  %s23 = inlined_call_operand.hbm [shape: f32[8,8], index: 23, kind: input, shape index: {}]
  %s24 = inlined_call_operand.hbm [shape: f32[2,8,64], index: 24, kind: output, shape index: {}]
  %s25 = sld [smem:[#allocation0]]
  $region193: #{block_forward.1} parent=0
    _
  %s27 = ssub.s32 1, %s25
  %s28 = scalar_select 0, %s27, %s25
  $region1: #{block_forward.1} parent=0
    #allocation2 [shape = 'u8[8192]{0}', space=vmem, size = 0x2000, scoped, tag = 'input window, operand 0']
    #allocation3 [shape = 's32[2]{0}', space=sflag, size = 0x8, scoped, tag = 'scoped memory for block_forward.1']
    #allocation4 [shape = 's32[2]{0}', space=sflag, size = 0x8, scoped, tag = 'scoped memory for block_forward.1']
    #allocation5 [shape = 's32[2]{0}', space=sflag, size = 0x8, scoped, tag = 'scoped memory for block_forward.1']
    #allocation6 [shape = 'u8[512]{0}', space=smem, size = 0x200, scoped, tag = 'input window, operand 1, single buffered']
    #allocation7 [shape = 'u8[512]{0}', space=vmem, size = 0x400, scoped, tag = 'input window, operand 6, single buffered']
    #allocation8 [shape = 's32[1]{0}', space=sflag, size = 0x4, scoped, tag = 'scoped memory for block_forward.1']
    #allocation9 [shape = 'u8[512]{0}', space=vmem, size = 0x400, scoped, tag = 'input window, operand 7, single buffered']
    #allocation10 [shape = 'u8[512]{0}', space=vmem, size = 0x400, scoped, tag = 'input window, operand 8, single buffered']
    #allocation11 [shape = 's32[1]{0}', space=sflag, size = 0x4, scoped, tag = 'scoped memory for block_forward.1']
    #allocation12 [shape = 'u8[512]{0}', space=vmem, size = 0x400, scoped, tag = 'input window, operand 9, single buffered']
    #allocation13 [shape = 'u8[512]{0}', space=vmem, size = 0x400, scoped, tag = 'input window, operand 11, single buffered']
    #allocation14 [shape = 's32[1]{0}', space=sflag, size = 0x4, scoped, tag = 'scoped memory for block_forward.1']
    #allocation15 [shape = 'u8[16384]{0}', space=vmem, size = 0x4000, scoped, tag = 'input window, operand 12, single buffered']
    #allocation16 [shape = 'u8[512]{0}', space=vmem, size = 0x400, scoped, tag = 'input window, operand 13, single buffered']
    #allocation17 [shape = 's32[1]{0}', space=sflag, size = 0x4, scoped, tag = 'scoped memory for block_forward.1']
    #allocation18 [shape = 'u8[16384]{0}', space=vmem, size = 0x4000, scoped, tag = 'input window, operand 14, single buffered']
    #allocation19 [shape = 'u8[512]{0}', space=vmem, size = 0x400, scoped, tag = 'input window, operand 15, single buffered']
    #allocation20 [shape = 's32[1]{0}', space=sflag, size = 0x4, scoped, tag = 'scoped memory for block_forward.1']
    #allocation21 [shape = 'u8[32768]{0}', space=vmem, size = 0x8000, scoped, tag = 'input window, operand 16, single buffered']
    #allocation22 [shape = 'u8[512]{0}', space=vmem, size = 0x400, scoped, tag = 'input window, operand 17, single buffered']
    #allocation23 [shape = 's32[1]{0}', space=sflag, size = 0x4, scoped, tag = 'scoped memory for block_forward.1']
    #allocation24 [shape = 'u8[512]{0}', space=vmem, size = 0x400, scoped, tag = 'input window, operand 21, single buffered']
    #allocation25 [shape = 'u8[4096]{0}', space=vmem, size = 0x1000, scoped, tag = 'input window, operand 22, single buffered']
    #allocation26 [shape = 's32[1]{0}', space=sflag, size = 0x4, scoped, tag = 'scoped memory for block_forward.1']
    #allocation27 [shape = 'u8[4096]{0}', space=vmem, size = 0x1000, scoped, tag = 'input window, operand 23, single buffered']
    #allocation28 [shape = 'u8[8192]{0}', space=vmem, size = 0x2000, scoped, tag = 'output window, operand 0']
    %29 = vsyncpa [#allocation3], 0
    %s30 = scalar_lea.sflag [#allocation3], 1
    %31 = vsyncpa %s30, 0
    %32 = vsyncpa [#allocation5], 0
    %33 = vsyncpa [#allocation8], 0
    %34 = vsyncpa [#allocation11], 0
    %35 = vsyncpa [#allocation14], 0
    %36 = vsyncpa [#allocation17], 0
    %37 = vsyncpa [#allocation20], 0
    %38 = vsyncpa [#allocation23], 0
    %39 = vsyncpa [#allocation26], 0
    %40 = vsyncpa [#allocation4], 0
    %s41 = scalar_lea.sflag [#allocation4], 1
    %42 = vsyncpa %s41, 0
    loop: start=0, step=1, limit=4
    $region2: #{block_forward.1} parent=1 // loop_pre_header
      _
    $region3: #{block_forward.1} parent=1 // loop_header
      %s44 = sphi 0, %s48
      %p45 = scmp.ge.s32.totalorder %s44, 4
      %s54 = sphi 0, %s56
      %s57 = sphi 0, %s54
      %s58 = sphi 0, %s57
      %s74 = sphi 0, %s58
      %s78 = sphi 0, %s78
      %s80 = sphi 0, %s78
      %s81 = sphi 0, %s80
      %s95 = sphi 0, %s81
      %s99 = sphi 0, %s99
      %s101 = sphi 0, %s99
      %s102 = sphi 0, %s101
      %s116 = sphi 0, %s102
      %s120 = sphi 0, %s120
      %s122 = sphi 0, %s120
      %s123 = sphi 0, %s122
      %s137 = sphi 0, %s123
      %s141 = sphi 0, %s141
      %s143 = sphi 0, %s141
      %s144 = sphi 0, %s143
      %s158 = sphi 0, %s144
      %s162 = sphi 0, %s162
      %s164 = sphi 0, %s162
      %s165 = sphi 0, %s164
      %s179 = sphi 0, %s165
      %s183 = sphi 0, %s183
      %s185 = sphi 0, %s183
      %s186 = sphi 0, %s185
      %s200 = sphi 0, %s186
      %s204 = sphi 0, %s204
      %s206 = sphi 0, %s204
      %s207 = sphi 0, %s206
      %s221 = sphi 0, %s207
      %s225 = sphi 0, %s225
      %s227 = sphi 0, %s225
      %s228 = sphi 0, %s227
      %s242 = sphi 0, %s228
      %s246 = sphi 0, %s246
      %s248 = sphi 0, %s246
      %s249 = sphi 0, %s248
      %s263 = sphi 0, %s249
      %s267 = sphi 0, %s267
      %s269 = sphi 0, %s267
      %s270 = sphi 0, %s269
      %s284 = sphi 0, %s270
      %s288 = sphi 0, %s288
      %s290 = sphi 0, %s288
      %s291 = sphi 0, %s290
      %s305 = sphi 0, %s291
      %s309 = sphi 0, %s309
      %s311 = sphi 0, %s309
      %s312 = sphi 0, %s311
      %s326 = sphi 0, %s312
      %s330 = sphi 0, %s330
      %s332 = sphi 0, %s330
      %s333 = sphi 0, %s332
      %s347 = sphi 0, %s333
      %s351 = sphi 0, %s351
      %s353 = sphi 0, %s351
      %s354 = sphi 0, %s353
      %s368 = sphi 0, %s354
      %s372 = sphi 0, %s372
      %s374 = sphi 0, %s372
      %s375 = sphi 0, %s374
      %s389 = sphi 0, %s375
      %s393 = sphi 0, %s393
      %s395 = sphi 0, %s393
      %s396 = sphi 0, %s395
      %s410 = sphi 0, %s396
      %s414 = sphi 0, %s414
      %s416 = sphi 0, %s414
      %s417 = sphi 0, %s416
      %s431 = sphi 0, %s417
      %s435 = sphi 0, %s435
      %s437 = sphi 0, %s435
      %s438 = sphi 0, %s437
      %s452 = sphi 0, %s438
      %s456 = sphi 0, %s456
      %s458 = sphi 0, %s456
      %s459 = sphi 0, %s458
      %s473 = sphi 0, %s459
      %s477 = sphi 0, %s477
      %s479 = sphi 0, %s477
      %s480 = sphi 0, %s479
      %s494 = sphi 0, %s480
      %s498 = sphi 0, %s498
      %s500 = sphi 0, %s498
      %s501 = sphi 0, %s500
      %s515 = sphi 0, %s501
      %s519 = sphi 0, %s519
      %s521 = sphi 0, %s519
      %s522 = sphi 0, %s521
      %s536 = sphi 0, %s522
      %s540 = sphi 0, %s540
      %s542 = sphi 0, %s540
      %s543 = sphi 0, %s542
      %s557 = sphi 0, %s543
      %s563 = sphi 0, %s565
      %s566 = sphi 0, %s563
      %s567 = sphi 0, %s566
      %s583 = sphi 0, %s567
    $region4: #{block_forward.1} parent=1 // loop_header_branch
      %47 = sbr.rel (%p45) target = $region8
    $region5: #{block_forward.1} parent=1 // loop_body
      %s49 = ssub.s32 %s44, 1
      %s50 = ssub.s32 %s44, 2
      %s51 = sadd.s32 %s44, 1
      %s52 = ssub.s32 %s44, %s51
      %p53 = scmp.eq.s32.totalorder %s52, 0
      %s55 = sadd.s32 %s54, 1
      %s56 = scalar_select %p53, %s54, %s55
      %p59 = pneg %p53
      %p60 = scmp.eq.s32.totalorder %s44, 1
      %p61 = por %p59, %p60
      %p62 = scmp.ne.s32.totalorder %s54, %s57
      %p63 = scmp.eq.s32.totalorder %s44, 0
      %p64 = por %p62, %p63
      %p65 = scmp.ne.s32.totalorder %s54, %s57
      %p66 = scmp.eq.s32.totalorder %s49, 1
      %p67 = por %p65, %p66
      %p68 = scmp.ne.s32.totalorder %s57, %s58
      %p69 = scmp.eq.s32.totalorder %s49, 0
      %p70 = por %p68, %p69
      %p71 = scmp.ne.s32.totalorder %s57, %s58
      %p72 = scmp.eq.s32.totalorder %s50, 1
      %p73 = por %p71, %p72
      %p75 = scmp.ne.s32.totalorder %s58, %s74
      %p76 = scmp.eq.s32.totalorder %s50, 0
      %p77 = por %p75, %p76
      %s79 = sadd.s32 %s78, 1
      %p82 = scmp.eq.s32.totalorder %s44, 1
      %p83 = scmp.ne.s32.totalorder %s78, %s80
      %p84 = scmp.eq.s32.totalorder %s44, 0
      %p85 = por %p83, %p84
      %p86 = scmp.ne.s32.totalorder %s78, %s80
      %p87 = scmp.eq.s32.totalorder %s49, 1
      %p88 = por %p86, %p87
      %p89 = scmp.ne.s32.totalorder %s80, %s81
      %p90 = scmp.eq.s32.totalorder %s49, 0
      %p91 = por %p89, %p90
      %p92 = scmp.ne.s32.totalorder %s80, %s81
      %p93 = scmp.eq.s32.totalorder %s50, 1
      %p94 = por %p92, %p93
      %p96 = scmp.ne.s32.totalorder %s81, %s95
      %p97 = scmp.eq.s32.totalorder %s50, 0
      %p98 = por %p96, %p97
      %s100 = sadd.s32 %s99, 1
      %p103 = scmp.eq.s32.totalorder %s44, 1
      %p104 = scmp.ne.s32.totalorder %s99, %s101
      %p105 = scmp.eq.s32.totalorder %s44, 0
      %p106 = por %p104, %p105
      %p107 = scmp.ne.s32.totalorder %s99, %s101
      %p108 = scmp.eq.s32.totalorder %s49, 1
      %p109 = por %p107, %p108
      %p110 = scmp.ne.s32.totalorder %s101, %s102
      %p111 = scmp.eq.s32.totalorder %s49, 0
      %p112 = por %p110, %p111
      %p113 = scmp.ne.s32.totalorder %s101, %s102
      %p114 = scmp.eq.s32.totalorder %s50, 1
      %p115 = por %p113, %p114
      %p117 = scmp.ne.s32.totalorder %s102, %s116
      %p118 = scmp.eq.s32.totalorder %s50, 0
      %p119 = por %p117, %p118
      %s121 = sadd.s32 %s120, 1
      %p124 = scmp.eq.s32.totalorder %s44, 1
      %p125 = scmp.ne.s32.totalorder %s120, %s122
      %p126 = scmp.eq.s32.totalorder %s44, 0
      %p127 = por %p125, %p126
      %p128 = scmp.ne.s32.totalorder %s120, %s122
      %p129 = scmp.eq.s32.totalorder %s49, 1
      %p130 = por %p128, %p129
      %p131 = scmp.ne.s32.totalorder %s122, %s123
      %p132 = scmp.eq.s32.totalorder %s49, 0
      %p133 = por %p131, %p132
      %p134 = scmp.ne.s32.totalorder %s122, %s123
      %p135 = scmp.eq.s32.totalorder %s50, 1
      %p136 = por %p134, %p135
      %p138 = scmp.ne.s32.totalorder %s123, %s137
      %p139 = scmp.eq.s32.totalorder %s50, 0
      %p140 = por %p138, %p139
      %s142 = sadd.s32 %s141, 1
      %p145 = scmp.eq.s32.totalorder %s44, 1
      %p146 = scmp.ne.s32.totalorder %s141, %s143
      %p147 = scmp.eq.s32.totalorder %s44, 0
      %p148 = por %p146, %p147
      %p149 = scmp.ne.s32.totalorder %s141, %s143
      %p150 = scmp.eq.s32.totalorder %s49, 1
      %p151 = por %p149, %p150
      %p152 = scmp.ne.s32.totalorder %s143, %s144
      %p153 = scmp.eq.s32.totalorder %s49, 0
      %p154 = por %p152, %p153
      %p155 = scmp.ne.s32.totalorder %s143, %s144
      %p156 = scmp.eq.s32.totalorder %s50, 1
      %p157 = por %p155, %p156
      %p159 = scmp.ne.s32.totalorder %s144, %s158
      %p160 = scmp.eq.s32.totalorder %s50, 0
      %p161 = por %p159, %p160
      %s163 = sadd.s32 %s162, 1
      %p166 = scmp.eq.s32.totalorder %s44, 1
      %p167 = scmp.ne.s32.totalorder %s162, %s164
      %p168 = scmp.eq.s32.totalorder %s44, 0
      %p169 = por %p167, %p168
      %p170 = scmp.ne.s32.totalorder %s162, %s164
      %p171 = scmp.eq.s32.totalorder %s49, 1
      %p172 = por %p170, %p171
      %p173 = scmp.ne.s32.totalorder %s164, %s165
      %p174 = scmp.eq.s32.totalorder %s49, 0
      %p175 = por %p173, %p174
      %p176 = scmp.ne.s32.totalorder %s164, %s165
      %p177 = scmp.eq.s32.totalorder %s50, 1
      %p178 = por %p176, %p177
      %p180 = scmp.ne.s32.totalorder %s165, %s179
      %p181 = scmp.eq.s32.totalorder %s50, 0
      %p182 = por %p180, %p181
      %s184 = sadd.s32 %s183, 1
      %p187 = scmp.eq.s32.totalorder %s44, 1
      %p188 = scmp.ne.s32.totalorder %s183, %s185
      %p189 = scmp.eq.s32.totalorder %s44, 0
      %p190 = por %p188, %p189
      %p191 = scmp.ne.s32.totalorder %s183, %s185
      %p192 = scmp.eq.s32.totalorder %s49, 1
      %p193 = por %p191, %p192
      %p194 = scmp.ne.s32.totalorder %s185, %s186
      %p195 = scmp.eq.s32.totalorder %s49, 0
      %p196 = por %p194, %p195
      %p197 = scmp.ne.s32.totalorder %s185, %s186
      %p198 = scmp.eq.s32.totalorder %s50, 1
      %p199 = por %p197, %p198
      %p201 = scmp.ne.s32.totalorder %s186, %s200
      %p202 = scmp.eq.s32.totalorder %s50, 0
      %p203 = por %p201, %p202
      %s205 = sadd.s32 %s204, 1
      %p208 = scmp.eq.s32.totalorder %s44, 1
      %p209 = scmp.ne.s32.totalorder %s204, %s206
      %p210 = scmp.eq.s32.totalorder %s44, 0
      %p211 = por %p209, %p210
      %p212 = scmp.ne.s32.totalorder %s204, %s206
      %p213 = scmp.eq.s32.totalorder %s49, 1
      %p214 = por %p212, %p213
      %p215 = scmp.ne.s32.totalorder %s206, %s207
      %p216 = scmp.eq.s32.totalorder %s49, 0
      %p217 = por %p215, %p216
      %p218 = scmp.ne.s32.totalorder %s206, %s207
      %p219 = scmp.eq.s32.totalorder %s50, 1
      %p220 = por %p218, %p219
      %p222 = scmp.ne.s32.totalorder %s207, %s221
      %p223 = scmp.eq.s32.totalorder %s50, 0
      %p224 = por %p222, %p223
      %s226 = sadd.s32 %s225, 1
      %p229 = scmp.eq.s32.totalorder %s44, 1
      %p230 = scmp.ne.s32.totalorder %s225, %s227
      %p231 = scmp.eq.s32.totalorder %s44, 0
      %p232 = por %p230, %p231
      %p233 = scmp.ne.s32.totalorder %s225, %s227
      %p234 = scmp.eq.s32.totalorder %s49, 1
      %p235 = por %p233, %p234
      %p236 = scmp.ne.s32.totalorder %s227, %s228
      %p237 = scmp.eq.s32.totalorder %s49, 0
      %p238 = por %p236, %p237
      %p239 = scmp.ne.s32.totalorder %s227, %s228
      %p240 = scmp.eq.s32.totalorder %s50, 1
      %p241 = por %p239, %p240
      %p243 = scmp.ne.s32.totalorder %s228, %s242
      %p244 = scmp.eq.s32.totalorder %s50, 0
      %p245 = por %p243, %p244
      %s247 = sadd.s32 %s246, 1
      %p250 = scmp.eq.s32.totalorder %s44, 1
      %p251 = scmp.ne.s32.totalorder %s246, %s248
      %p252 = scmp.eq.s32.totalorder %s44, 0
      %p253 = por %p251, %p252
      %p254 = scmp.ne.s32.totalorder %s246, %s248
      %p255 = scmp.eq.s32.totalorder %s49, 1
      %p256 = por %p254, %p255
      %p257 = scmp.ne.s32.totalorder %s248, %s249
      %p258 = scmp.eq.s32.totalorder %s49, 0
      %p259 = por %p257, %p258
      %p260 = scmp.ne.s32.totalorder %s248, %s249
      %p261 = scmp.eq.s32.totalorder %s50, 1
      %p262 = por %p260, %p261
      %p264 = scmp.ne.s32.totalorder %s249, %s263
      %p265 = scmp.eq.s32.totalorder %s50, 0
      %p266 = por %p264, %p265
      %s268 = sadd.s32 %s267, 1
      %p271 = scmp.eq.s32.totalorder %s44, 1
      %p272 = scmp.ne.s32.totalorder %s267, %s269
      %p273 = scmp.eq.s32.totalorder %s44, 0
      %p274 = por %p272, %p273
      %p275 = scmp.ne.s32.totalorder %s267, %s269
      %p276 = scmp.eq.s32.totalorder %s49, 1
      %p277 = por %p275, %p276
      %p278 = scmp.ne.s32.totalorder %s269, %s270
      %p279 = scmp.eq.s32.totalorder %s49, 0
      %p280 = por %p278, %p279
      %p281 = scmp.ne.s32.totalorder %s269, %s270
      %p282 = scmp.eq.s32.totalorder %s50, 1
      %p283 = por %p281, %p282
      %p285 = scmp.ne.s32.totalorder %s270, %s284
      %p286 = scmp.eq.s32.totalorder %s50, 0
      %p287 = por %p285, %p286
      %s289 = sadd.s32 %s288, 1
      %p292 = scmp.eq.s32.totalorder %s44, 1
      %p293 = scmp.ne.s32.totalorder %s288, %s290
      %p294 = scmp.eq.s32.totalorder %s44, 0
      %p295 = por %p293, %p294
      %p296 = scmp.ne.s32.totalorder %s288, %s290
      %p297 = scmp.eq.s32.totalorder %s49, 1
      %p298 = por %p296, %p297
      %p299 = scmp.ne.s32.totalorder %s290, %s291
      %p300 = scmp.eq.s32.totalorder %s49, 0
      %p301 = por %p299, %p300
      %p302 = scmp.ne.s32.totalorder %s290, %s291
      %p303 = scmp.eq.s32.totalorder %s50, 1
      %p304 = por %p302, %p303
      %p306 = scmp.ne.s32.totalorder %s291, %s305
      %p307 = scmp.eq.s32.totalorder %s50, 0
      %p308 = por %p306, %p307
      %s310 = sadd.s32 %s309, 1
      %p313 = scmp.eq.s32.totalorder %s44, 1
      %p314 = scmp.ne.s32.totalorder %s309, %s311
      %p315 = scmp.eq.s32.totalorder %s44, 0
      %p316 = por %p314, %p315
      %p317 = scmp.ne.s32.totalorder %s309, %s311
      %p318 = scmp.eq.s32.totalorder %s49, 1
      %p319 = por %p317, %p318
      %p320 = scmp.ne.s32.totalorder %s311, %s312
      %p321 = scmp.eq.s32.totalorder %s49, 0
      %p322 = por %p320, %p321
      %p323 = scmp.ne.s32.totalorder %s311, %s312
      %p324 = scmp.eq.s32.totalorder %s50, 1
      %p325 = por %p323, %p324
      %p327 = scmp.ne.s32.totalorder %s312, %s326
      %p328 = scmp.eq.s32.totalorder %s50, 0
      %p329 = por %p327, %p328
      %s331 = sadd.s32 %s330, 1
      %p334 = scmp.eq.s32.totalorder %s44, 1
      %p335 = scmp.ne.s32.totalorder %s330, %s332
      %p336 = scmp.eq.s32.totalorder %s44, 0
      %p337 = por %p335, %p336
      %p338 = scmp.ne.s32.totalorder %s330, %s332
      %p339 = scmp.eq.s32.totalorder %s49, 1
      %p340 = por %p338, %p339
      %p341 = scmp.ne.s32.totalorder %s332, %s333
      %p342 = scmp.eq.s32.totalorder %s49, 0
      %p343 = por %p341, %p342
      %p344 = scmp.ne.s32.totalorder %s332, %s333
      %p345 = scmp.eq.s32.totalorder %s50, 1
      %p346 = por %p344, %p345
      %p348 = scmp.ne.s32.totalorder %s333, %s347
      %p349 = scmp.eq.s32.totalorder %s50, 0
      %p350 = por %p348, %p349
      %s352 = sadd.s32 %s351, 1
      %p355 = scmp.eq.s32.totalorder %s44, 1
      %p356 = scmp.ne.s32.totalorder %s351, %s353
      %p357 = scmp.eq.s32.totalorder %s44, 0
      %p358 = por %p356, %p357
      %p359 = scmp.ne.s32.totalorder %s351, %s353
      %p360 = scmp.eq.s32.totalorder %s49, 1
      %p361 = por %p359, %p360
      %p362 = scmp.ne.s32.totalorder %s353, %s354
      %p363 = scmp.eq.s32.totalorder %s49, 0
      %p364 = por %p362, %p363
      %p365 = scmp.ne.s32.totalorder %s353, %s354
      %p366 = scmp.eq.s32.totalorder %s50, 1
      %p367 = por %p365, %p366
      %p369 = scmp.ne.s32.totalorder %s354, %s368
      %p370 = scmp.eq.s32.totalorder %s50, 0
      %p371 = por %p369, %p370
      %s373 = sadd.s32 %s372, 1
      %p376 = scmp.eq.s32.totalorder %s44, 1
      %p377 = scmp.ne.s32.totalorder %s372, %s374
      %p378 = scmp.eq.s32.totalorder %s44, 0
      %p379 = por %p377, %p378
      %p380 = scmp.ne.s32.totalorder %s372, %s374
      %p381 = scmp.eq.s32.totalorder %s49, 1
      %p382 = por %p380, %p381
      %p383 = scmp.ne.s32.totalorder %s374, %s375
      %p384 = scmp.eq.s32.totalorder %s49, 0
      %p385 = por %p383, %p384
      %p386 = scmp.ne.s32.totalorder %s374, %s375
      %p387 = scmp.eq.s32.totalorder %s50, 1
      %p388 = por %p386, %p387
      %p390 = scmp.ne.s32.totalorder %s375, %s389
      %p391 = scmp.eq.s32.totalorder %s50, 0
      %p392 = por %p390, %p391
      %s394 = sadd.s32 %s393, 1
      %p397 = scmp.eq.s32.totalorder %s44, 1
      %p398 = scmp.ne.s32.totalorder %s393, %s395
      %p399 = scmp.eq.s32.totalorder %s44, 0
      %p400 = por %p398, %p399
      %p401 = scmp.ne.s32.totalorder %s393, %s395
      %p402 = scmp.eq.s32.totalorder %s49, 1
      %p403 = por %p401, %p402
      %p404 = scmp.ne.s32.totalorder %s395, %s396
      %p405 = scmp.eq.s32.totalorder %s49, 0
      %p406 = por %p404, %p405
      %p407 = scmp.ne.s32.totalorder %s395, %s396
      %p408 = scmp.eq.s32.totalorder %s50, 1
      %p409 = por %p407, %p408
      %p411 = scmp.ne.s32.totalorder %s396, %s410
      %p412 = scmp.eq.s32.totalorder %s50, 0
      %p413 = por %p411, %p412
      %s415 = sadd.s32 %s414, 1
      %p418 = scmp.eq.s32.totalorder %s44, 1
      %p419 = scmp.ne.s32.totalorder %s414, %s416
      %p420 = scmp.eq.s32.totalorder %s44, 0
      %p421 = por %p419, %p420
      %p422 = scmp.ne.s32.totalorder %s414, %s416
      %p423 = scmp.eq.s32.totalorder %s49, 1
      %p424 = por %p422, %p423
      %p425 = scmp.ne.s32.totalorder %s416, %s417
      %p426 = scmp.eq.s32.totalorder %s49, 0
      %p427 = por %p425, %p426
      %p428 = scmp.ne.s32.totalorder %s416, %s417
      %p429 = scmp.eq.s32.totalorder %s50, 1
      %p430 = por %p428, %p429
      %p432 = scmp.ne.s32.totalorder %s417, %s431
      %p433 = scmp.eq.s32.totalorder %s50, 0
      %p434 = por %p432, %p433
      %s436 = sadd.s32 %s435, 1
      %p439 = scmp.eq.s32.totalorder %s44, 1
      %p440 = scmp.ne.s32.totalorder %s435, %s437
      %p441 = scmp.eq.s32.totalorder %s44, 0
      %p442 = por %p440, %p441
      %p443 = scmp.ne.s32.totalorder %s435, %s437
      %p444 = scmp.eq.s32.totalorder %s49, 1
      %p445 = por %p443, %p444
      %p446 = scmp.ne.s32.totalorder %s437, %s438
      %p447 = scmp.eq.s32.totalorder %s49, 0
      %p448 = por %p446, %p447
      %p449 = scmp.ne.s32.totalorder %s437, %s438
      %p450 = scmp.eq.s32.totalorder %s50, 1
      %p451 = por %p449, %p450
      %p453 = scmp.ne.s32.totalorder %s438, %s452
      %p454 = scmp.eq.s32.totalorder %s50, 0
      %p455 = por %p453, %p454
      %s457 = sadd.s32 %s456, 1
      %p460 = scmp.eq.s32.totalorder %s44, 1
      %p461 = scmp.ne.s32.totalorder %s456, %s458
      %p462 = scmp.eq.s32.totalorder %s44, 0
      %p463 = por %p461, %p462
      %p464 = scmp.ne.s32.totalorder %s456, %s458
      %p465 = scmp.eq.s32.totalorder %s49, 1
      %p466 = por %p464, %p465
      %p467 = scmp.ne.s32.totalorder %s458, %s459
      %p468 = scmp.eq.s32.totalorder %s49, 0
      %p469 = por %p467, %p468
      %p470 = scmp.ne.s32.totalorder %s458, %s459
      %p471 = scmp.eq.s32.totalorder %s50, 1
      %p472 = por %p470, %p471
      %p474 = scmp.ne.s32.totalorder %s459, %s473
      %p475 = scmp.eq.s32.totalorder %s50, 0
      %p476 = por %p474, %p475
      %s478 = sadd.s32 %s477, 1
      %p481 = scmp.eq.s32.totalorder %s44, 1
      %p482 = scmp.ne.s32.totalorder %s477, %s479
      %p483 = scmp.eq.s32.totalorder %s44, 0
      %p484 = por %p482, %p483
      %p485 = scmp.ne.s32.totalorder %s477, %s479
      %p486 = scmp.eq.s32.totalorder %s49, 1
      %p487 = por %p485, %p486
      %p488 = scmp.ne.s32.totalorder %s479, %s480
      %p489 = scmp.eq.s32.totalorder %s49, 0
      %p490 = por %p488, %p489
      %p491 = scmp.ne.s32.totalorder %s479, %s480
      %p492 = scmp.eq.s32.totalorder %s50, 1
      %p493 = por %p491, %p492
      %p495 = scmp.ne.s32.totalorder %s480, %s494
      %p496 = scmp.eq.s32.totalorder %s50, 0
      %p497 = por %p495, %p496
      %s499 = sadd.s32 %s498, 1
      %p502 = scmp.eq.s32.totalorder %s44, 1
      %p503 = scmp.ne.s32.totalorder %s498, %s500
      %p504 = scmp.eq.s32.totalorder %s44, 0
      %p505 = por %p503, %p504
      %p506 = scmp.ne.s32.totalorder %s498, %s500
      %p507 = scmp.eq.s32.totalorder %s49, 1
      %p508 = por %p506, %p507
      %p509 = scmp.ne.s32.totalorder %s500, %s501
      %p510 = scmp.eq.s32.totalorder %s49, 0
      %p511 = por %p509, %p510
      %p512 = scmp.ne.s32.totalorder %s500, %s501
      %p513 = scmp.eq.s32.totalorder %s50, 1
      %p514 = por %p512, %p513
      %p516 = scmp.ne.s32.totalorder %s501, %s515
      %p517 = scmp.eq.s32.totalorder %s50, 0
      %p518 = por %p516, %p517
      %s520 = sadd.s32 %s519, 1
      %p523 = scmp.eq.s32.totalorder %s44, 1
      %p524 = scmp.ne.s32.totalorder %s519, %s521
      %p525 = scmp.eq.s32.totalorder %s44, 0
      %p526 = por %p524, %p525
      %p527 = scmp.ne.s32.totalorder %s519, %s521
      %p528 = scmp.eq.s32.totalorder %s49, 1
      %p529 = por %p527, %p528
      %p530 = scmp.ne.s32.totalorder %s521, %s522
      %p531 = scmp.eq.s32.totalorder %s49, 0
      %p532 = por %p530, %p531
      %p533 = scmp.ne.s32.totalorder %s521, %s522
      %p534 = scmp.eq.s32.totalorder %s50, 1
      %p535 = por %p533, %p534
      %p537 = scmp.ne.s32.totalorder %s522, %s536
      %p538 = scmp.eq.s32.totalorder %s50, 0
      %p539 = por %p537, %p538
      %s541 = sadd.s32 %s540, 1
      %p544 = scmp.eq.s32.totalorder %s44, 1
      %p545 = scmp.ne.s32.totalorder %s540, %s542
      %p546 = scmp.eq.s32.totalorder %s44, 0
      %p547 = por %p545, %p546
      %p548 = scmp.ne.s32.totalorder %s540, %s542
      %p549 = scmp.eq.s32.totalorder %s49, 1
      %p550 = por %p548, %p549
      %p551 = scmp.ne.s32.totalorder %s542, %s543
      %p552 = scmp.eq.s32.totalorder %s49, 0
      %p553 = por %p551, %p552
      %p554 = scmp.ne.s32.totalorder %s542, %s543
      %p555 = scmp.eq.s32.totalorder %s50, 1
      %p556 = por %p554, %p555
      %p558 = scmp.ne.s32.totalorder %s543, %s557
      %p559 = scmp.eq.s32.totalorder %s50, 0
      %p560 = por %p558, %p559
      %s561 = ssub.s32 %s44, %s51
      %p562 = scmp.eq.s32.totalorder %s561, 0
      %s564 = sadd.s32 %s563, 1
      %s565 = scalar_select %p562, %s563, %s564
      %p568 = pneg %p562
      %p569 = scmp.eq.s32.totalorder %s44, 1
      %p570 = por %p568, %p569
      %p571 = scmp.ne.s32.totalorder %s563, %s566
      %p572 = scmp.eq.s32.totalorder %s44, 0
      %p573 = por %p571, %p572
      %p574 = scmp.ne.s32.totalorder %s563, %s566
      %p575 = scmp.eq.s32.totalorder %s49, 1
      %p576 = por %p574, %p575
      %p577 = scmp.ne.s32.totalorder %s566, %s567
      %p578 = scmp.eq.s32.totalorder %s49, 0
      %p579 = por %p577, %p578
      %p580 = scmp.ne.s32.totalorder %s566, %s567
      %p581 = scmp.eq.s32.totalorder %s50, 1
      %p582 = por %p580, %p581
      %p584 = scmp.ne.s32.totalorder %s567, %s583
      %p585 = scmp.eq.s32.totalorder %s50, 0
      %p586 = por %p584, %p585
      %p587 = scmp.le.s32.totalorder 1, %s44
      %p588 = scmp.lt.s32.totalorder %s44, 3
      %p589 = pnand %p587, %p588
      %p590 = pneg %p589
      // Predicated region
      $region9: #{block_forward.1} parent=5 // pred_check
        _
      $region10: #{block_forward.1} parent=5 // pred_check_branch
        %592 = sbr.rel (%p589) target = $region12
      $region11: #{block_forward.1} parent=5 // pred_region
        %s593 = ssub.s32 %s44, 1
        // Predicated region
        $region13: #{block_forward.1} parent=11 // pred_check
          %p594 = pneg %p91
        $region14: #{block_forward.1} parent=11 // pred_check_branch
          %596 = sbr.rel (%p594) target = $region16
        $region15: #{block_forward.1} parent=11 // pred_region
          %s598 = ssub.s32 16, 16
          %599 = vsyncadd [#allocation5], %s598
          %s601 = sshll.u32 %s1, 4
          %s602 = int_to_ptr.vmem [resolvable:$true] %s601
          %604 = dma.vmem_to_smem %s602, 16, [#allocation6], [#allocation5]
        $region16: #{block_forward.1} parent=11 // pred_fallthru
          _
        // Predicated region
        $region17: #{block_forward.1} parent=11 // pred_check
          %p605 = pneg %p112
        $region18: #{block_forward.1} parent=11 // pred_check_branch
          %607 = sbr.rel (%p605) target = $region20
        $region19: #{block_forward.1} parent=11 // pred_region
          _
        $region20: #{block_forward.1} parent=11 // pred_fallthru
          _
        // Predicated region
        $region21: #{block_forward.1} parent=11 // pred_check
          %p608 = pneg %p133
        $region22: #{block_forward.1} parent=11 // pred_check_branch
          %610 = sbr.rel (%p608) target = $region24
        $region23: #{block_forward.1} parent=11 // pred_region
          _
        $region24: #{block_forward.1} parent=11 // pred_fallthru
          _
        // Predicated region
        $region25: #{block_forward.1} parent=11 // pred_check
          %p611 = pneg %p154
        $region26: #{block_forward.1} parent=11 // pred_check_branch
          %613 = sbr.rel (%p611) target = $region28
        $region27: #{block_forward.1} parent=11 // pred_region
          _
        $region28: #{block_forward.1} parent=11 // pred_fallthru
          _
        // Predicated region
        $region29: #{block_forward.1} parent=11 // pred_check
          %p614 = pneg %p175
        $region30: #{block_forward.1} parent=11 // pred_check_branch
          %616 = sbr.rel (%p614) target = $region32
        $region31: #{block_forward.1} parent=11 // pred_region
          _
        $region32: #{block_forward.1} parent=11 // pred_fallthru
          _
        // Predicated region
        $region33: #{block_forward.1} parent=11 // pred_check
          %p617 = pneg %p196
        $region34: #{block_forward.1} parent=11 // pred_check_branch
          %619 = sbr.rel (%p617) target = $region36
        $region35: #{block_forward.1} parent=11 // pred_region
          %s621 = ssub.s32 16, 16
          %622 = vsyncadd [#allocation8], %s621
          %s624 = sshll.u32 [#allocation7], 4
          %s625 = int_to_ptr.vmem [resolvable:$true] %s624
          %627 = dma.hbm_to_vmem [thread:$0]  %s6, 16, %s625, [#allocation8]
        $region36: #{block_forward.1} parent=11 // pred_fallthru
          _
        // Predicated region
        $region37: #{block_forward.1} parent=11 // pred_check
          %p628 = pneg %p217
        $region38: #{block_forward.1} parent=11 // pred_check_branch
          %630 = sbr.rel (%p628) target = $region40
        $region39: #{block_forward.1} parent=11 // pred_region
          %s632 = ssub.s32 16, 16
          %633 = vsyncadd [#allocation8], %s632
          %s635 = sshll.u32 [#allocation9], 4
          %s636 = int_to_ptr.vmem [resolvable:$true] %s635
          %638 = dma.hbm_to_vmem [thread:$0]  %s7, 16, %s636, [#allocation8]
        $region40: #{block_forward.1} parent=11 // pred_fallthru
          _
        // Predicated region
        $region41: #{block_forward.1} parent=11 // pred_check
          %p639 = pneg %p238
        $region42: #{block_forward.1} parent=11 // pred_check_branch
          %641 = sbr.rel (%p639) target = $region44
        $region43: #{block_forward.1} parent=11 // pred_region
          %s643 = ssub.s32 16, 16
          %644 = vsyncadd [#allocation11], %s643
          %s646 = sshll.u32 [#allocation10], 4
          %s647 = int_to_ptr.vmem [resolvable:$true] %s646
          %649 = dma.hbm_to_vmem [thread:$0]  %s8, 16, %s647, [#allocation11]
        $region44: #{block_forward.1} parent=11 // pred_fallthru
          _
        // Predicated region
        $region45: #{block_forward.1} parent=11 // pred_check
          %p650 = pneg %p259
        $region46: #{block_forward.1} parent=11 // pred_check_branch
          %652 = sbr.rel (%p650) target = $region48
        $region47: #{block_forward.1} parent=11 // pred_region
          %s654 = ssub.s32 16, 16
          %655 = vsyncadd [#allocation11], %s654
          %s657 = sshll.u32 [#allocation12], 4
          %s658 = int_to_ptr.vmem [resolvable:$true] %s657
          %660 = dma.hbm_to_vmem [thread:$0]  %s9, 16, %s658, [#allocation11]
        $region48: #{block_forward.1} parent=11 // pred_fallthru
          _
        // Predicated region
        $region49: #{block_forward.1} parent=11 // pred_check
          %p661 = pneg %p280
        $region50: #{block_forward.1} parent=11 // pred_check_branch
          %663 = sbr.rel (%p661) target = $region52
        $region51: #{block_forward.1} parent=11 // pred_region
          _
        $region52: #{block_forward.1} parent=11 // pred_fallthru
          _
        // Predicated region
        $region53: #{block_forward.1} parent=11 // pred_check
          %p664 = pneg %p301
        $region54: #{block_forward.1} parent=11 // pred_check_branch
          %666 = sbr.rel (%p664) target = $region56
        $region55: #{block_forward.1} parent=11 // pred_region
          %s668 = ssub.s32 16, 16
          %669 = vsyncadd [#allocation14], %s668
          %s671 = sshll.u32 [#allocation13], 4
          %s672 = int_to_ptr.vmem [resolvable:$true] %s671
          %674 = dma.hbm_to_vmem [thread:$0]  %s11, 16, %s672, [#allocation14]
        $region56: #{block_forward.1} parent=11 // pred_fallthru
          _
        // Predicated region
        $region57: #{block_forward.1} parent=11 // pred_check
          %p675 = pneg %p322
        $region58: #{block_forward.1} parent=11 // pred_check_branch
          %677 = sbr.rel (%p675) target = $region60
        $region59: #{block_forward.1} parent=11 // pred_region
          %s679 = ssub.s32 512, 512
          %680 = vsyncadd [#allocation14], %s679
          %s681 = sshll.u32 [#allocation15], 4
          %s682 = int_to_ptr.vmem [resolvable:$true] %s681
          %687 = dma.hbm_to_vmem [thread:$0]  %s12, 512, %s682, [#allocation14], 128, 128, 8
        $region60: #{block_forward.1} parent=11 // pred_fallthru
          _
        // Predicated region
        $region61: #{block_forward.1} parent=11 // pred_check
          %p688 = pneg %p343
        $region62: #{block_forward.1} parent=11 // pred_check_branch
          %690 = sbr.rel (%p688) target = $region64
        $region63: #{block_forward.1} parent=11 // pred_region
          %s692 = ssub.s32 16, 16
          %693 = vsyncadd [#allocation17], %s692
          %s695 = sshll.u32 [#allocation16], 4
          %s696 = int_to_ptr.vmem [resolvable:$true] %s695
          %698 = dma.hbm_to_vmem [thread:$0]  %s13, 16, %s696, [#allocation17]
        $region64: #{block_forward.1} parent=11 // pred_fallthru
          _
        // Predicated region
        $region65: #{block_forward.1} parent=11 // pred_check
          %p699 = pneg %p364
        $region66: #{block_forward.1} parent=11 // pred_check_branch
          %701 = sbr.rel (%p699) target = $region68
        $region67: #{block_forward.1} parent=11 // pred_region
          %s703 = ssub.s32 512, 512
          %704 = vsyncadd [#allocation17], %s703
          %s705 = sshll.u32 [#allocation18], 4
          %s706 = int_to_ptr.vmem [resolvable:$true] %s705
          %711 = dma.hbm_to_vmem [thread:$0]  %s14, 512, %s706, [#allocation17], 128, 128, 8
        $region68: #{block_forward.1} parent=11 // pred_fallthru
          _
        // Predicated region
        $region69: #{block_forward.1} parent=11 // pred_check
          %p712 = pneg %p385
        $region70: #{block_forward.1} parent=11 // pred_check_branch
          %714 = sbr.rel (%p712) target = $region72
        $region71: #{block_forward.1} parent=11 // pred_region
          %s716 = ssub.s32 16, 16
          %717 = vsyncadd [#allocation20], %s716
          %s719 = sshll.u32 [#allocation19], 4
          %s720 = int_to_ptr.vmem [resolvable:$true] %s719
          %722 = dma.hbm_to_vmem [thread:$0]  %s15, 16, %s720, [#allocation20]
        $region72: #{block_forward.1} parent=11 // pred_fallthru
          _
        // Predicated region
        $region73: #{block_forward.1} parent=11 // pred_check
          %p723 = pneg %p406
        $region74: #{block_forward.1} parent=11 // pred_check_branch
          %725 = sbr.rel (%p723) target = $region76
        $region75: #{block_forward.1} parent=11 // pred_region
          %s727 = ssub.s32 1024, 1024
          %728 = vsyncadd [#allocation20], %s727
          %s729 = sshll.u32 [#allocation21], 4
          %s730 = int_to_ptr.vmem [resolvable:$true] %s729
          %735 = dma.hbm_to_vmem [thread:$0]  %s16, 1024, %s730, [#allocation20], 128, 128, 8
        $region76: #{block_forward.1} parent=11 // pred_fallthru
          _
        // Predicated region
        $region77: #{block_forward.1} parent=11 // pred_check
          %p736 = pneg %p427
        $region78: #{block_forward.1} parent=11 // pred_check_branch
          %738 = sbr.rel (%p736) target = $region80
        $region79: #{block_forward.1} parent=11 // pred_region
          %s740 = ssub.s32 16, 16
          %741 = vsyncadd [#allocation23], %s740
          %s743 = sshll.u32 [#allocation22], 4
          %s744 = int_to_ptr.vmem [resolvable:$true] %s743
          %746 = dma.hbm_to_vmem [thread:$0]  %s17, 16, %s744, [#allocation23]
        $region80: #{block_forward.1} parent=11 // pred_fallthru
          _
        // Predicated region
        $region81: #{block_forward.1} parent=11 // pred_check
          %p747 = pneg %p448
        $region82: #{block_forward.1} parent=11 // pred_check_branch
          %749 = sbr.rel (%p747) target = $region84
        $region83: #{block_forward.1} parent=11 // pred_region
          _
        $region84: #{block_forward.1} parent=11 // pred_fallthru
          _
        // Predicated region
        $region85: #{block_forward.1} parent=11 // pred_check
          %p750 = pneg %p469
        $region86: #{block_forward.1} parent=11 // pred_check_branch
          %752 = sbr.rel (%p750) target = $region88
        $region87: #{block_forward.1} parent=11 // pred_region
          _
        $region88: #{block_forward.1} parent=11 // pred_fallthru
          _
        // Predicated region
        $region89: #{block_forward.1} parent=11 // pred_check
          %p753 = pneg %p490
        $region90: #{block_forward.1} parent=11 // pred_check_branch
          %755 = sbr.rel (%p753) target = $region92
        $region91: #{block_forward.1} parent=11 // pred_region
          _
        $region92: #{block_forward.1} parent=11 // pred_fallthru
          _
        // Predicated region
        $region93: #{block_forward.1} parent=11 // pred_check
          %p756 = pneg %p511
        $region94: #{block_forward.1} parent=11 // pred_check_branch
          %758 = sbr.rel (%p756) target = $region96
        $region95: #{block_forward.1} parent=11 // pred_region
          %s760 = ssub.s32 16, 16
          %761 = vsyncadd [#allocation23], %s760
          %s763 = sshll.u32 [#allocation24], 4
          %s764 = int_to_ptr.vmem [resolvable:$true] %s763
          %766 = dma.hbm_to_vmem [thread:$0]  %s21, 16, %s764, [#allocation23]
        $region96: #{block_forward.1} parent=11 // pred_fallthru
          _
        // Predicated region
        $region97: #{block_forward.1} parent=11 // pred_check
          %p767 = pneg %p532
        $region98: #{block_forward.1} parent=11 // pred_check_branch
          %769 = sbr.rel (%p767) target = $region100
        $region99: #{block_forward.1} parent=11 // pred_region
          %s771 = ssub.s32 128, 128
          %772 = vsyncadd [#allocation26], %s771
          %s774 = sshll.u32 [#allocation25], 4
          %s775 = int_to_ptr.vmem [resolvable:$true] %s774
          %777 = dma.hbm_to_vmem [thread:$0]  %s22, 128, %s775, [#allocation26]
        $region100: #{block_forward.1} parent=11 // pred_fallthru
          _
        // Predicated region
        $region101: #{block_forward.1} parent=11 // pred_check
          %p778 = pneg %p553
        $region102: #{block_forward.1} parent=11 // pred_check_branch
          %780 = sbr.rel (%p778) target = $region104
        $region103: #{block_forward.1} parent=11 // pred_region
          %s782 = ssub.s32 128, 128
          %783 = vsyncadd [#allocation26], %s782
          %s785 = sshll.u32 [#allocation27], 4
          %s786 = int_to_ptr.vmem [resolvable:$true] %s785
          %788 = dma.hbm_to_vmem [thread:$0]  %s23, 128, %s786, [#allocation26]
        $region104: #{block_forward.1} parent=11 // pred_fallthru
          _
      $region12: #{block_forward.1} parent=5 // pred_fallthru
        _
      %p789 = scmp.lt.s32.totalorder %s44, 2
      // Predicated region
      $region105: #{block_forward.1} parent=5 // pred_check
        %p790 = pneg %p789
      $region106: #{block_forward.1} parent=5 // pred_check_branch
        %792 = sbr.rel (%p790) target = $region108
      $region107: #{block_forward.1} parent=5 // pred_region
        // Predicated region
        $region109: #{block_forward.1} parent=107 // pred_check
          %p793 = pneg %p64
        $region110: #{block_forward.1} parent=107 // pred_check_branch
          %795 = sbr.rel (%p793) target = $region112
        $region111: #{block_forward.1} parent=107 // pred_region
          %s796 = sand.u32 %s54, 1
          %s797 = scalar_lea.sflag [#allocation3], %s796
          %s798 = sand.u32 %s54, 1
          %s799 = smul.addr %s798, 8
          %s800 = scalar_lea.vmem [#allocation2], %s799
          %s802 = ssub.s32 128, 128
          %803 = vsyncadd %s797, %s802
          %s804 = smul.addr %s44, 128
          %s805 = scalar_lea.hbm %s0, %s804
          %s807 = sshll.u32 %s800, 4
          %s808 = int_to_ptr.vmem [resolvable:$true] %s807
          %810 = dma.hbm_to_vmem [thread:$0]  %s805, 128, %s808, %s797
        $region112: #{block_forward.1} parent=107 // pred_fallthru
          _
      $region108: #{block_forward.1} parent=5 // pred_fallthru
        _
      %p811 = scmp.le.s32.totalorder 1, %s44
      %p812 = scmp.lt.s32.totalorder %s44, 3
      %p813 = pnand %p811, %p812
      %p814 = pneg %p813
      // Predicated region
      $region113: #{block_forward.1} parent=5 // pred_check
        _
      $region114: #{block_forward.1} parent=5 // pred_check_branch
        %816 = sbr.rel (%p813) target = $region116
      $region115: #{block_forward.1} parent=5 // pred_region
        %s817 = ssub.s32 %s44, 1
        %s818 = sand.u32 %s57, 1
        %s819 = scalar_lea.sflag [#allocation3], %s818
        %s820 = sand.u32 %s57, 1
        %s821 = smul.addr %s820, 8
        %s822 = scalar_lea.vmem [#allocation2], %s821
        // Predicated region
        $region117: #{block_forward.1} parent=115 // pred_check
          %p823 = pneg %p70
        $region118: #{block_forward.1} parent=115 // pred_check_branch
          %825 = sbr.rel (%p823) target = $region120
        $region119: #{block_forward.1} parent=115 // pred_region
          %826 = dma.done %s819, 128
        $region120: #{block_forward.1} parent=115 // pred_fallthru
          _
        // Predicated region
        $region121: #{block_forward.1} parent=115 // pred_check
          %p827 = pneg %p91
        $region122: #{block_forward.1} parent=115 // pred_check_branch
          %829 = sbr.rel (%p827) target = $region124
        $region123: #{block_forward.1} parent=115 // pred_region
          %830 = dma.done [#allocation5], 16
        $region124: #{block_forward.1} parent=115 // pred_fallthru
          _
        // Predicated region
        $region125: #{block_forward.1} parent=115 // pred_check
          %p831 = pneg %p196
        $region126: #{block_forward.1} parent=115 // pred_check_branch
          %833 = sbr.rel (%p831) target = $region128
        $region127: #{block_forward.1} parent=115 // pred_region
          %834 = dma.done [#allocation8], 16
        $region128: #{block_forward.1} parent=115 // pred_fallthru
          _
        // Predicated region
        $region129: #{block_forward.1} parent=115 // pred_check
          %p835 = pneg %p217
        $region130: #{block_forward.1} parent=115 // pred_check_branch
          %837 = sbr.rel (%p835) target = $region132
        $region131: #{block_forward.1} parent=115 // pred_region
          %838 = dma.done [#allocation8], 16
        $region132: #{block_forward.1} parent=115 // pred_fallthru
          _
        // Predicated region
        $region133: #{block_forward.1} parent=115 // pred_check
          %p839 = pneg %p238
        $region134: #{block_forward.1} parent=115 // pred_check_branch
          %841 = sbr.rel (%p839) target = $region136
        $region135: #{block_forward.1} parent=115 // pred_region
          %842 = dma.done [#allocation11], 16
        $region136: #{block_forward.1} parent=115 // pred_fallthru
          _
        // Predicated region
        $region137: #{block_forward.1} parent=115 // pred_check
          %p843 = pneg %p259
        $region138: #{block_forward.1} parent=115 // pred_check_branch
          %845 = sbr.rel (%p843) target = $region140
        $region139: #{block_forward.1} parent=115 // pred_region
          %846 = dma.done [#allocation11], 16
        $region140: #{block_forward.1} parent=115 // pred_fallthru
          _
        // Predicated region
        $region141: #{block_forward.1} parent=115 // pred_check
          %p847 = pneg %p301
        $region142: #{block_forward.1} parent=115 // pred_check_branch
          %849 = sbr.rel (%p847) target = $region144
        $region143: #{block_forward.1} parent=115 // pred_region
          %850 = dma.done [#allocation14], 16
        $region144: #{block_forward.1} parent=115 // pred_fallthru
          _
        // Predicated region
        $region145: #{block_forward.1} parent=115 // pred_check
          %p851 = pneg %p322
        $region146: #{block_forward.1} parent=115 // pred_check_branch
          %853 = sbr.rel (%p851) target = $region148
        $region147: #{block_forward.1} parent=115 // pred_region
          %854 = dma.done [#allocation14], 512
        $region148: #{block_forward.1} parent=115 // pred_fallthru
          _
        // Predicated region
        $region149: #{block_forward.1} parent=115 // pred_check
          %p855 = pneg %p343
        $region150: #{block_forward.1} parent=115 // pred_check_branch
          %857 = sbr.rel (%p855) target = $region152
        $region151: #{block_forward.1} parent=115 // pred_region
          %858 = dma.done [#allocation17], 16
        $region152: #{block_forward.1} parent=115 // pred_fallthru
          _
        // Predicated region
        $region153: #{block_forward.1} parent=115 // pred_check
          %p859 = pneg %p364
        $region154: #{block_forward.1} parent=115 // pred_check_branch
          %861 = sbr.rel (%p859) target = $region156
        $region155: #{block_forward.1} parent=115 // pred_region
          %862 = dma.done [#allocation17], 512
        $region156: #{block_forward.1} parent=115 // pred_fallthru
          _
        // Predicated region
        $region157: #{block_forward.1} parent=115 // pred_check
          %p863 = pneg %p385
        $region158: #{block_forward.1} parent=115 // pred_check_branch
          %865 = sbr.rel (%p863) target = $region160
        $region159: #{block_forward.1} parent=115 // pred_region
          %866 = dma.done [#allocation20], 16
        $region160: #{block_forward.1} parent=115 // pred_fallthru
          _
        // Predicated region
        $region161: #{block_forward.1} parent=115 // pred_check
          %p867 = pneg %p406
        $region162: #{block_forward.1} parent=115 // pred_check_branch
          %869 = sbr.rel (%p867) target = $region164
        $region163: #{block_forward.1} parent=115 // pred_region
          %870 = dma.done [#allocation20], 1024
        $region164: #{block_forward.1} parent=115 // pred_fallthru
          _
        // Predicated region
        $region165: #{block_forward.1} parent=115 // pred_check
          %p871 = pneg %p427
        $region166: #{block_forward.1} parent=115 // pred_check_branch
          %873 = sbr.rel (%p871) target = $region168
        $region167: #{block_forward.1} parent=115 // pred_region
          %874 = dma.done [#allocation23], 16
        $region168: #{block_forward.1} parent=115 // pred_fallthru
          _
        // Predicated region
        $region169: #{block_forward.1} parent=115 // pred_check
          %p875 = pneg %p511
        $region170: #{block_forward.1} parent=115 // pred_check_branch
          %877 = sbr.rel (%p875) target = $region172
        $region171: #{block_forward.1} parent=115 // pred_region
          %878 = dma.done [#allocation23], 16
        $region172: #{block_forward.1} parent=115 // pred_fallthru
          _
        // Predicated region
        $region173: #{block_forward.1} parent=115 // pred_check
          %p879 = pneg %p532
        $region174: #{block_forward.1} parent=115 // pred_check_branch
          %881 = sbr.rel (%p879) target = $region176
        $region175: #{block_forward.1} parent=115 // pred_region
          %882 = dma.done [#allocation26], 128
        $region176: #{block_forward.1} parent=115 // pred_fallthru
          _
        // Predicated region
        $region177: #{block_forward.1} parent=115 // pred_check
          %p883 = pneg %p553
        $region178: #{block_forward.1} parent=115 // pred_check_branch
          %885 = sbr.rel (%p883) target = $region180
        $region179: #{block_forward.1} parent=115 // pred_region
          %886 = dma.done [#allocation26], 128
        $region180: #{block_forward.1} parent=115 // pred_fallthru
          _
        %887 = sfence
        %s888 = sand.u32 %s57, 1
        %s889 = scalar_lea.sflag [#allocation3], %s888
        %s890 = sand.u32 %s57, 1
        %s891 = smul.addr %s890, 8
        %s892 = scalar_lea.vmem [#allocation2], %s891
        %p893 = pneg %p70
        %p894 = pneg %p67
        %p895 = pneg %p91
        %p896 = pneg %p88
        %p897 = pneg %p112
        %p898 = pneg %p109
        %p899 = pneg %p133
        %p900 = pneg %p130
        %p901 = pneg %p154
        %p902 = pneg %p151
        %p903 = pneg %p175
        %p904 = pneg %p172
        %p905 = pneg %p196
        %p906 = pneg %p193
        %p907 = pneg %p217
        %p908 = pneg %p214
        %p909 = pneg %p238
        %p910 = pneg %p235
        %p911 = pneg %p259
        %p912 = pneg %p256
        %p913 = pneg %p280
        %p914 = pneg %p277
        %p915 = pneg %p301
        %p916 = pneg %p298
        %p917 = pneg %p322
        %p918 = pneg %p319
        %p919 = pneg %p343
        %p920 = pneg %p340
        %p921 = pneg %p364
        %p922 = pneg %p361
        %p923 = pneg %p385
        %p924 = pneg %p382
        %p925 = pneg %p406
        %p926 = pneg %p403
        %p927 = pneg %p427
        %p928 = pneg %p424
        %p929 = pneg %p448
        %p930 = pneg %p445
        %p931 = pneg %p469
        %p932 = pneg %p466
        %p933 = pneg %p490
        %p934 = pneg %p487
        %p935 = pneg %p511
        %p936 = pneg %p508
        %p937 = pneg %p532
        %p938 = pneg %p529
        %p939 = pneg %p553
        %p940 = pneg %p550
        %p941 = pneg %p579
        %p942 = pneg %p576
        %s943 = sand.u32 %s566, 1
        %s944 = scalar_lea.sflag [#allocation4], %s943
        %s945 = sand.u32 %s566, 1
        %s946 = smul.addr %s945, 8
        %s947 = scalar_lea.vmem [#allocation28], %s946
        %v948 = vld [vmem:[%s822] sm:$0xff]
        %s949 = sld [smem:[#allocation6]]
        %v950 = vld [vmem:[%s2] sm:$0x1]
        %v951 = vld [vmem:[%s3] sm:$0x1]
        %v952 = vstv %s949
        %v953 = vmul.f32 %v952, %v948
        %v954 = vtanh.pop %v953
        %v956 = vlaneseq
        %v957 = vshrl.u32 %v956, 7
        %v958 = vsub.s32 0, %v957
        %v959 = vrot.slane %v950, %v958
        %v961 = vmul.f32 %v959, %v954
        %v963 = vlaneseq
        %v964 = vshrl.u32 %v963, 7
        %v965 = vsub.s32 0, %v964
        %v966 = vrot.slane %v951, %v965
        %v968 = vadd.f32 %v961, %v966
        %v969 = vld [vmem:[%s10] sm:$0xff]
        %v970 = vld [vmem:[%s10 + $0x8] sm:$0xff]
        %v971 = vld [vmem:[%s10 + $0x10] sm:$0xff]
        %v972 = vld [vmem:[%s10 + $0x18] sm:$0xff]
        %v973 = vld [vmem:[%s10 + $0x20] sm:$0xff]
        %v974 = vld [vmem:[%s10 + $0x28] sm:$0xff]
        %v975 = vld [vmem:[%s10 + $0x30] sm:$0xff]
        %v976 = vld [vmem:[%s10 + $0x38] sm:$0xff]
        %v977 = vld [vmem:[#allocation13] sm:$0x1]
        %v979 = vlaneseq
        %v980 = vshrl.u32 %v979, 7
        %v981 = vsub.s32 0, %v980
        %v982 = vrot.slane %v977, %v981
        %vm984 = vcmask 523264
        %v986 = vsel %vm984, %v968, 0
        %988 = vmatprep.subr.mxu0 0.0
        %989 = vmatpush1.msra.mxu0 %v969
        %990 = vmatprep.subr.mxu0 0.0
        %991 = vmatpush1.msra.mxu0 %v970
        %992 = vmatprep.subr.mxu0 0.0
        %993 = vmatpush1.msra.mxu0 %v971
        %994 = vmatprep.subr.mxu0 0.0
        %995 = vmatpush1.msra.mxu0 %v972
        %996 = vmatprep.subr.mxu0 0.0
        %997 = vmatpush1.msra.mxu0 %v973
        %998 = vmatprep.subr.mxu0 0.0
        %999 = vmatpush1.msra.mxu0 %v974
        %1000 = vmatprep.subr.mxu0 0.0
        %1001 = vmatpush1.msra.mxu0 %v975
        %1002 = vmatprep.subr.mxu0 0.0
        %1003 = vmatpush1.msra.mxu0 %v976
        %1004 = vmatprep.subr.mxu0 0.0
        %1005 = vmatpush1.msra.mxu0 0.0
        %1006 = vmatprep.subr.mxu0 0.0
        %1007 = vmatpush1.msra.mxu0 0.0
        %1008 = vmatprep.subr.mxu0 0.0
        %1009 = vmatpush1.msra.mxu0 0.0
        %1010 = vmatprep.subr.mxu0 0.0
        %1011 = vmatpush1.msra.mxu0 0.0
        %1012 = vmatprep.subr.mxu0 0.0
        %1013 = vmatpush1.msra.mxu0 0.0
        %1014 = vmatprep.subr.mxu0 0.0
        %1015 = vmatpush1.msra.mxu0 0.0
        %1016 = vmatprep.subr.mxu0 0.0
        %1017 = vmatpush1.msra.mxu0 0.0
        %1018 = vmatprep.subr.mxu0 0.0
        %1019 = vmatpush1.msra.mxu0 0.0
        %1020 = vmatprep.subr.mxu0 0.0
        %1021 = vmatpush1.msra.mxu0 0.0
        %1022 = vmatprep.subr.mxu0 0.0
        %1023 = vmatpush1.msra.mxu0 0.0
        %1024 = vmatprep.subr.mxu0 0.0
        %1025 = vmatpush1.msra.mxu0 0.0
        %1026 = vmatprep.subr.mxu0 0.0
        %1027 = vmatpush1.msra.mxu0 0.0
        %1028 = vmatprep.subr.mxu0 0.0
        %1029 = vmatpush1.msra.mxu0 0.0
        %1030 = vmatprep.subr.mxu0 0.0
        %1031 = vmatpush1.msra.mxu0 0.0
        %1032 = vmatprep.subr.mxu0 0.0
        %1033 = vmatpush1.msra.mxu0 0.0
        %1034 = vmatprep.subr.mxu0 0.0
        %1035 = vmatpush1.msra.mxu0 0.0
        %1036 = vmatprep.subr.mxu0 0.0
        %1037 = vmatpush1.msra.mxu0 0.0
        %1038 = vmatprep.subr.mxu0 0.0
        %1039 = vmatpush1.msra.mxu0 0.0
        %1040 = vmatprep.subr.mxu0 0.0
        %1041 = vmatpush1.msra.mxu0 0.0
        %1042 = vmatprep.subr.mxu0 0.0
        %1043 = vmatpush1.msra.mxu0 0.0
        %1044 = vmatprep.subr.mxu0 0.0
        %1045 = vmatpush1.msra.mxu0 0.0
        %1046 = vmatprep.subr.mxu0 0.0
        %1047 = vmatpush1.msra.mxu0 0.0
        %1048 = vmatprep.subr.mxu0 0.0
        %1049 = vmatpush1.msra.mxu0 0.0
        %1050 = vmatprep.subr.mxu0 0.0
        %1051 = vmatpush1.msra.mxu0 0.0
        %1052 = vmatprep.mubr.f32.mxu0 0.0
        %1053 = vmatmul.mubr.f32.gmra.mrb[0].mxu0 %v986
        %v1054 = vpop.f32.mrb[0].mxu0
        %v1055 = vadd.f32 %v982, %v1054
        %v1056 = vpop.f32.mrb[0].mxu0
        %1057 = vdwg.mxu0
        %s1058 = sld [smem:[#allocation6 + $0x1]]
        %v1059 = vld [vmem:[%s4] sm:$0x1]
        %v1060 = vld [vmem:[%s5] sm:$0x1]
        %v1061 = vstv %s1058
        %v1062 = vmul.f32 %v1061, %v1055
        %v1063 = vtanh.pop %v1062
        %v1065 = vlaneseq
        %v1066 = vshrl.u32 %v1065, 7
        %v1067 = vsub.s32 0, %v1066
        %v1068 = vrot.slane %v1059, %v1067
        %v1070 = vmul.f32 %v1068, %v1063
        %v1072 = vlaneseq
        %v1073 = vshrl.u32 %v1072, 7
        %v1074 = vsub.s32 0, %v1073
        %v1075 = vrot.slane %v1060, %v1074
        %v1077 = vadd.f32 %v1070, %v1075
        %v1078 = vld [vmem:[#allocation15] sm:$0xff]
        %v1079 = vld [vmem:[#allocation15 + $0x8] sm:$0xff]
        %v1080 = vld [vmem:[#allocation15 + $0x10] sm:$0xff]
        %v1081 = vld [vmem:[#allocation15 + $0x18] sm:$0xff]
        %v1082 = vld [vmem:[#allocation16] sm:$0x1]
        %v1084 = vlaneseq
        %v1085 = vshrl.u32 %v1084, 7
        %v1086 = vsub.s32 0, %v1085
        %v1087 = vrot.slane %v1082, %v1086
        %vm1089 = vcmask 261120
        %v1091 = vsel %vm1089, %v1077, 0
        %1093 = vmatprep.subr.mxu0 0.0
        %1094 = vmatpush1.msra.mxu0 %v1078
        %1095 = vmatprep.subr.mxu0 0.0
        %1096 = vmatpush1.msra.mxu0 %v1079
        %1097 = vmatprep.subr.mxu0 0.0
        %1098 = vmatpush1.msra.mxu0 %v1080
        %1099 = vmatprep.subr.mxu0 0.0
        %1100 = vmatpush1.msra.mxu0 %v1081
        %1101 = vmatprep.subr.mxu0 0.0
        %1102 = vmatpush1.msra.mxu0 0.0
        %1103 = vmatprep.subr.mxu0 0.0
        %1104 = vmatpush1.msra.mxu0 0.0
        %1105 = vmatprep.subr.mxu0 0.0
        %1106 = vmatpush1.msra.mxu0 0.0
        %1107 = vmatprep.subr.mxu0 0.0
        %1108 = vmatpush1.msra.mxu0 0.0
        %1109 = vmatprep.subr.mxu0 0.0
        %1110 = vmatpush1.msra.mxu0 0.0
        %1111 = vmatprep.subr.mxu0 0.0
        %1112 = vmatpush1.msra.mxu0 0.0
        %1113 = vmatprep.subr.mxu0 0.0
        %1114 = vmatpush1.msra.mxu0 0.0
        %1115 = vmatprep.subr.mxu0 0.0
        %1116 = vmatpush1.msra.mxu0 0.0
        %1117 = vmatprep.subr.mxu0 0.0
        %1118 = vmatpush1.msra.mxu0 0.0
        %1119 = vmatprep.subr.mxu0 0.0
        %1120 = vmatpush1.msra.mxu0 0.0
        %1121 = vmatprep.subr.mxu0 0.0
        %1122 = vmatpush1.msra.mxu0 0.0
        %1123 = vmatprep.subr.mxu0 0.0
        %1124 = vmatpush1.msra.mxu0 0.0
        %1125 = vmatprep.subr.mxu0 0.0
        %1126 = vmatpush1.msra.mxu0 0.0
        %1127 = vmatprep.subr.mxu0 0.0
        %1128 = vmatpush1.msra.mxu0 0.0
        %1129 = vmatprep.subr.mxu0 0.0
        %1130 = vmatpush1.msra.mxu0 0.0
        %1131 = vmatprep.subr.mxu0 0.0
        %1132 = vmatpush1.msra.mxu0 0.0
        %1133 = vmatprep.subr.mxu0 0.0
        %1134 = vmatpush1.msra.mxu0 0.0
        %1135 = vmatprep.subr.mxu0 0.0
        %1136 = vmatpush1.msra.mxu0 0.0
        %1137 = vmatprep.subr.mxu0 0.0
        %1138 = vmatpush1.msra.mxu0 0.0
        %1139 = vmatprep.subr.mxu0 0.0
        %1140 = vmatpush1.msra.mxu0 0.0
        %1141 = vmatprep.subr.mxu0 0.0
        %1142 = vmatpush1.msra.mxu0 0.0
        %1143 = vmatprep.subr.mxu0 0.0
        %1144 = vmatpush1.msra.mxu0 0.0
        %1145 = vmatprep.subr.mxu0 0.0
        %1146 = vmatpush1.msra.mxu0 0.0
        %1147 = vmatprep.subr.mxu0 0.0
        %1148 = vmatpush1.msra.mxu0 0.0
        %1149 = vmatprep.subr.mxu0 0.0
        %1150 = vmatpush1.msra.mxu0 0.0
        %1151 = vmatprep.subr.mxu0 0.0
        %1152 = vmatpush1.msra.mxu0 0.0
        %1153 = vmatprep.subr.mxu0 0.0
        %1154 = vmatpush1.msra.mxu0 0.0
        %1155 = vmatprep.subr.mxu0 0.0
        %1156 = vmatpush1.msra.mxu0 0.0
        %1157 = vmatprep.mubr.f32.mxu0 0.0
        %1158 = vmatmul.mubr.f32.gmra.mrb[0].mxu0 %v1091
        %v1159 = vpop.f32.mrb[0].mxu0
        %v1160 = vadd.f32 %v1087, %v1159
        %v1161 = vpop.f32.mrb[0].mxu0
        %1162 = vdwg.mxu0
        %s1163 = sld [smem:[#allocation6 + $0x2]]
        %v1164 = vld [vmem:[#allocation7] sm:$0x1]
        %v1165 = vld [vmem:[#allocation9] sm:$0x1]
        %v1166 = vstv %s1163
        %v1167 = vmul.f32 %v1166, %v1055
        %v1168 = vtanh.pop %v1167
        %v1170 = vlaneseq
        %v1171 = vshrl.u32 %v1170, 7
        %v1172 = vsub.s32 0, %v1171
        %v1173 = vrot.slane %v1164, %v1172
        %1176 = vrot.lane.b32.xlu0 %v1168, 96
        %v1177 = vpop.permute.xlu0 %1176
        %v1179 = vmul.f32 %v1173, %v1177
        %v1181 = vlaneseq
        %v1182 = vshrl.u32 %v1181, 7
        %v1183 = vsub.s32 0, %v1182
        %v1184 = vrot.slane %v1165, %v1183
        %v1186 = vadd.f32 %v1179, %v1184
        %v1187 = vld [vmem:[#allocation18] sm:$0xff]
        %v1188 = vld [vmem:[#allocation18 + $0x8] sm:$0xff]
        %v1189 = vld [vmem:[#allocation18 + $0x10] sm:$0xff]
        %v1190 = vld [vmem:[#allocation18 + $0x18] sm:$0xff]
        %v1191 = vld [vmem:[#allocation19] sm:$0x1]
        %v1193 = vlaneseq
        %v1194 = vshrl.u32 %v1193, 7
        %v1195 = vsub.s32 0, %v1194
        %v1196 = vrot.slane %v1191, %v1195
        %v1199 = vsel %vm1089, %v1186, 0
        %1201 = vmatprep.subr.mxu0 0.0
        %1202 = vmatpush1.msra.mxu0 %v1187
        %1203 = vmatprep.subr.mxu0 0.0
        %1204 = vmatpush1.msra.mxu0 %v1188
        %1205 = vmatprep.subr.mxu0 0.0
        %1206 = vmatpush1.msra.mxu0 %v1189
        %1207 = vmatprep.subr.mxu0 0.0
        %1208 = vmatpush1.msra.mxu0 %v1190
        %1209 = vmatprep.subr.mxu0 0.0
        %1210 = vmatpush1.msra.mxu0 0.0
        %1211 = vmatprep.subr.mxu0 0.0
        %1212 = vmatpush1.msra.mxu0 0.0
        %1213 = vmatprep.subr.mxu0 0.0
        %1214 = vmatpush1.msra.mxu0 0.0
        %1215 = vmatprep.subr.mxu0 0.0
        %1216 = vmatpush1.msra.mxu0 0.0
        %1217 = vmatprep.subr.mxu0 0.0
        %1218 = vmatpush1.msra.mxu0 0.0
        %1219 = vmatprep.subr.mxu0 0.0
        %1220 = vmatpush1.msra.mxu0 0.0
        %1221 = vmatprep.subr.mxu0 0.0
        %1222 = vmatpush1.msra.mxu0 0.0
        %1223 = vmatprep.subr.mxu0 0.0
        %1224 = vmatpush1.msra.mxu0 0.0
        %1225 = vmatprep.subr.mxu0 0.0
        %1226 = vmatpush1.msra.mxu0 0.0
        %1227 = vmatprep.subr.mxu0 0.0
        %1228 = vmatpush1.msra.mxu0 0.0
        %1229 = vmatprep.subr.mxu0 0.0
        %1230 = vmatpush1.msra.mxu0 0.0
        %1231 = vmatprep.subr.mxu0 0.0
        %1232 = vmatpush1.msra.mxu0 0.0
        %1233 = vmatprep.subr.mxu0 0.0
        %1234 = vmatpush1.msra.mxu0 0.0
        %1235 = vmatprep.subr.mxu0 0.0
        %1236 = vmatpush1.msra.mxu0 0.0
        %1237 = vmatprep.subr.mxu0 0.0
        %1238 = vmatpush1.msra.mxu0 0.0
        %1239 = vmatprep.subr.mxu0 0.0
        %1240 = vmatpush1.msra.mxu0 0.0
        %1241 = vmatprep.subr.mxu0 0.0
        %1242 = vmatpush1.msra.mxu0 0.0
        %1243 = vmatprep.subr.mxu0 0.0
        %1244 = vmatpush1.msra.mxu0 0.0
        %1245 = vmatprep.subr.mxu0 0.0
        %1246 = vmatpush1.msra.mxu0 0.0
        %1247 = vmatprep.subr.mxu0 0.0
        %1248 = vmatpush1.msra.mxu0 0.0
        %1249 = vmatprep.subr.mxu0 0.0
        %1250 = vmatpush1.msra.mxu0 0.0
        %1251 = vmatprep.subr.mxu0 0.0
        %1252 = vmatpush1.msra.mxu0 0.0
        %1253 = vmatprep.subr.mxu0 0.0
        %1254 = vmatpush1.msra.mxu0 0.0
        %1255 = vmatprep.subr.mxu0 0.0
        %1256 = vmatpush1.msra.mxu0 0.0
        %1257 = vmatprep.subr.mxu0 0.0
        %1258 = vmatpush1.msra.mxu0 0.0
        %1259 = vmatprep.subr.mxu0 0.0
        %1260 = vmatpush1.msra.mxu0 0.0
        %1261 = vmatprep.subr.mxu0 0.0
        %1262 = vmatpush1.msra.mxu0 0.0
        %1263 = vmatprep.subr.mxu0 0.0
        %1264 = vmatpush1.msra.mxu0 0.0
        %1265 = vmatprep.mubr.f32.mxu0 0.0
        %1266 = vmatmul.mubr.f32.gmra.mrb[0].mxu0 %v1199
        %v1267 = vpop.f32.mrb[0].mxu0
        %v1268 = vadd.f32 %v1196, %v1267
        %v1269 = vpop.f32.mrb[0].mxu0
        %1270 = vdwg.mxu0
        %v1271 = vld [vmem:[#allocation25] sm:$0xff]
        %v1272 = vld [vmem:[#allocation27] sm:$0xff]
        %1274 = vrot.lane.b32.xlu0 %v1271, 64
        %v1275 = vpop.permute.xlu0 %1274
        %v1277 = vmul.f32 %v1055, %v1275
        %1279 = vrot.lane.b32.xlu0 %v1272, 72
        %v1280 = vpop.permute.xlu0 %1279
        %v1282 = vmul.f32 %v1055, %v1280
        %1284 = vrot.lane.b32.xlu0 %v1282, 120
        %v1285 = vpop.permute.xlu0 %1284
        %v1287 = vsub.f32 %v1277, %v1285
        %1288 = vrot.lane.b32.xlu0 %v1272, 64
        %v1289 = vpop.permute.xlu0 %1288
        %v1291 = vmul.f32 %v1055, %v1289
        %1292 = vrot.lane.b32.xlu0 %v1271, 72
        %v1293 = vpop.permute.xlu0 %1292
        %v1295 = vmul.f32 %v1055, %v1293
        %1297 = vrot.lane.b32.xlu0 %v1295, 120
        %v1298 = vpop.permute.xlu0 %1297
        %v1300 = vadd.f32 %v1291, %v1298
        %1302 = vrot.lane.b32.xlu0 %v1287, 64
        %v1303 = vpop.permute.xlu0 %1302
        %1306 = vrot.lane.b32.xlu0 %v1300, 72
        %v1307 = vpop.permute.xlu0 %1306
        %vm1309 = vcmask 64512
        %v1310 = vsel %vm1309, %v1303, %v1307
        %v1311 = vlaneseq
        %v1312 = vshrl.u32 %v1311, 7
        %v1313 = vlaneseq
        %v1314 = vand.u32 %v1313, 127
        %vm1315 = vcmp.ge.s32.totalorder %v1312, %v1314
        %1316 = vrot.lane.b32.xlu0 %v1271, 32
        %v1317 = vpop.permute.xlu0 %1316
        %v1319 = vmul.f32 %v1160, %v1317
        %1320 = vrot.lane.b32.xlu0 %v1272, 40
        %v1321 = vpop.permute.xlu0 %1320
        %v1323 = vmul.f32 %v1160, %v1321
        %1325 = vrot.lane.b32.xlu0 %v1323, 120
        %v1326 = vpop.permute.xlu0 %1325
        %v1328 = vsub.f32 %v1319, %v1326
        %1329 = vrot.lane.b32.xlu0 %v1272, 32
        %v1330 = vpop.permute.xlu0 %1329
        %v1332 = vmul.f32 %v1160, %v1330
        %1333 = vrot.lane.b32.xlu0 %v1271, 40
        %v1334 = vpop.permute.xlu0 %1333
        %v1336 = vmul.f32 %v1160, %v1334
        %1338 = vrot.lane.b32.xlu0 %v1336, 120
        %v1339 = vpop.permute.xlu0 %1338
        %v1341 = vadd.f32 %v1332, %v1339
        %1343 = vrot.lane.b32.xlu0 %v1328, 96
        %v1344 = vpop.permute.xlu0 %1343
        %1347 = vrot.lane.b32.xlu0 %v1341, 104
        %v1348 = vpop.permute.xlu0 %1347
        %v1350 = vsel %vm1309, %v1344, %v1348
        %1352 = vrot.lane.b32.xlu0 %v1350, 32
        %v1353 = vpop.permute.xlu0 %1352
        %v1355 = vsel %vm1089, %v1160, %v1353
        %1357 = vrot.lane.b32.xlu0 %v1310, 32
        %v1358 = vpop.permute.xlu0 %1357
        %v1360 = vsel %vm1089, %v1268, %v1358
        %vm1361 = vcmask 392192
        %v1363 = vsel %vm1361, %v1355, 0
        %v1366 = vsel %vm1361, %v1360, 0
        %1368 = vmatprep.subr.mxu0 0.0
        %1369 = vmatpush1.xpose.msra.mxu0 %v1366
        %1370 = vmatprep.subr.mxu0 0.0
        %1371 = vmatpush1.xpose.msra.mxu0 0.0
        %1372 = vmatprep.subr.mxu0 0.0
        %1373 = vmatpush1.xpose.msra.mxu0 0.0
        %1374 = vmatprep.subr.mxu0 0.0
        %1375 = vmatpush1.xpose.msra.mxu0 0.0
        %1376 = vmatprep.subr.mxu0 0.0
        %1377 = vmatpush1.xpose.msra.mxu0 0.0
        %1378 = vmatprep.subr.mxu0 0.0
        %1379 = vmatpush1.xpose.msra.mxu0 0.0
        %1380 = vmatprep.subr.mxu0 0.0
        %1381 = vmatpush1.xpose.msra.mxu0 0.0
        %1382 = vmatprep.subr.mxu0 0.0
        %1383 = vmatpush1.xpose.msra.mxu0 0.0
        %1384 = vmatprep.subr.mxu0 0.0
        %1385 = vmatpush1.xpose.msra.mxu0 0.0
        %1386 = vmatprep.subr.mxu0 0.0
        %1387 = vmatpush1.xpose.msra.mxu0 0.0
        %1388 = vmatprep.subr.mxu0 0.0
        %1389 = vmatpush1.xpose.msra.mxu0 0.0
        %1390 = vmatprep.subr.mxu0 0.0
        %1391 = vmatpush1.xpose.msra.mxu0 0.0
        %1392 = vmatprep.subr.mxu0 0.0
        %1393 = vmatpush1.xpose.msra.mxu0 0.0
        %1394 = vmatprep.subr.mxu0 0.0
        %1395 = vmatpush1.xpose.msra.mxu0 0.0
        %1396 = vmatprep.subr.mxu0 0.0
        %1397 = vmatpush1.xpose.msra.mxu0 0.0
        %1398 = vmatprep.subr.mxu0 0.0
        %1399 = vmatpush1.xpose.msra.mxu0 0.0
        %1400 = vmatprep.subr.mxu0 0.0
        %1401 = vmatpush1.xpose.msra.mxu0 0.0
        %1402 = vmatprep.subr.mxu0 0.0
        %1403 = vmatpush1.xpose.msra.mxu0 0.0
        %1404 = vmatprep.subr.mxu0 0.0
        %1405 = vmatpush1.xpose.msra.mxu0 0.0
        %1406 = vmatprep.subr.mxu0 0.0
        %1407 = vmatpush1.xpose.msra.mxu0 0.0
        %1408 = vmatprep.subr.mxu0 0.0
        %1409 = vmatpush1.xpose.msra.mxu0 0.0
        %1410 = vmatprep.subr.mxu0 0.0
        %1411 = vmatpush1.xpose.msra.mxu0 0.0
        %1412 = vmatprep.subr.mxu0 0.0
        %1413 = vmatpush1.xpose.msra.mxu0 0.0
        %1414 = vmatprep.subr.mxu0 0.0
        %1415 = vmatpush1.xpose.msra.mxu0 0.0
        %1416 = vmatprep.subr.mxu0 0.0
        %1417 = vmatpush1.xpose.msra.mxu0 0.0
        %1418 = vmatprep.subr.mxu0 0.0
        %1419 = vmatpush1.xpose.msra.mxu0 0.0
        %1420 = vmatprep.subr.mxu0 0.0
        %1421 = vmatpush1.xpose.msra.mxu0 0.0
        %1422 = vmatprep.subr.mxu0 0.0
        %1423 = vmatpush1.xpose.msra.mxu0 0.0
        %1424 = vmatprep.subr.mxu0 0.0
        %1425 = vmatpush1.xpose.msra.mxu0 0.0
        %1426 = vmatprep.subr.mxu0 0.0
        %1427 = vmatpush1.xpose.msra.mxu0 0.0
        %1428 = vmatprep.subr.mxu0 0.0
        %1429 = vmatpush1.xpose.msra.mxu0 0.0
        %1430 = vmatprep.subr.mxu0 0.0
        %1431 = vmatpush1.xpose.msra.mxu0 0.0
        %1432 = vmatprep.mubr.f32.mxu0 0.0
        %1433 = vmatmul.mubr.f32.gmra.mrb[0].mxu0 %v1363
        %v1434 = vpop.f32.mrb[0].mxu0
        %v1435 = vadd.f32 0.0, %v1434
        %v1436 = vpop.f32.mrb[0].mxu0
        %1437 = vdwg.mxu0
        %v1438 = vmul.f32 %v1435, 0.14433756
        %v1439 = vsel %vm1315, %v1438, -inf
        %v1440 = vsel %vm1309, %v1439, -inf
        %1441 = vmax.xlane.f32.xlu0 %v1440
        %v1442 = vpop.xlane.xlu0 %1441
        %v1443 = vsub.f32 %v1439, %v1442
        %v1444 = vmul.f32 %v1443, 1.442695
        %v1445 = vpow.pop %v1444
        %v1446 = vsel %vm1309, %v1445, 0.0
        %1447 = vadd.xlane.f32.xlu0 %v1446
        %v1448 = vpop.xlane.xlu0 %1447
        %v1449 = vrcp.pop %v1448
        %v1450 = vmul.f32 %v1445, %v1449
        %1452 = vrot.lane.b32.xlu0 %v1268, 96
        %v1453 = vpop.permute.xlu0 %1452
        %v1456 = vsel %vm1309, %v1450, 0
        %1458 = vmatprep.subr.mxu0 0.0
        %1459 = vmatpush1.msra.mxu0 %v1453
        %1460 = vmatprep.subr.mxu0 0.0
        %1461 = vmatpush1.msra.mxu0 0.0
        %1462 = vmatprep.subr.mxu0 0.0
        %1463 = vmatpush1.msra.mxu0 0.0
        %1464 = vmatprep.subr.mxu0 0.0
        %1465 = vmatpush1.msra.mxu0 0.0
        %1466 = vmatprep.subr.mxu0 0.0
        %1467 = vmatpush1.msra.mxu0 0.0
        %1468 = vmatprep.subr.mxu0 0.0
        %1469 = vmatpush1.msra.mxu0 0.0
        %1470 = vmatprep.subr.mxu0 0.0
        %1471 = vmatpush1.msra.mxu0 0.0
        %1472 = vmatprep.subr.mxu0 0.0
        %1473 = vmatpush1.msra.mxu0 0.0
        %1474 = vmatprep.subr.mxu0 0.0
        %1475 = vmatpush1.msra.mxu0 0.0
        %1476 = vmatprep.subr.mxu0 0.0
        %1477 = vmatpush1.msra.mxu0 0.0
        %1478 = vmatprep.subr.mxu0 0.0
        %1479 = vmatpush1.msra.mxu0 0.0
        %1480 = vmatprep.subr.mxu0 0.0
        %1481 = vmatpush1.msra.mxu0 0.0
        %1482 = vmatprep.subr.mxu0 0.0
        %1483 = vmatpush1.msra.mxu0 0.0
        %1484 = vmatprep.subr.mxu0 0.0
        %1485 = vmatpush1.msra.mxu0 0.0
        %1486 = vmatprep.subr.mxu0 0.0
        %1487 = vmatpush1.msra.mxu0 0.0
        %1488 = vmatprep.subr.mxu0 0.0
        %1489 = vmatpush1.msra.mxu0 0.0
        %1490 = vmatprep.subr.mxu0 0.0
        %1491 = vmatpush1.msra.mxu0 0.0
        %1492 = vmatprep.subr.mxu0 0.0
        %1493 = vmatpush1.msra.mxu0 0.0
        %1494 = vmatprep.subr.mxu0 0.0
        %1495 = vmatpush1.msra.mxu0 0.0
        %1496 = vmatprep.subr.mxu0 0.0
        %1497 = vmatpush1.msra.mxu0 0.0
        %1498 = vmatprep.subr.mxu0 0.0
        %1499 = vmatpush1.msra.mxu0 0.0
        %1500 = vmatprep.subr.mxu0 0.0
        %1501 = vmatpush1.msra.mxu0 0.0
        %1502 = vmatprep.subr.mxu0 0.0
        %1503 = vmatpush1.msra.mxu0 0.0
        %1504 = vmatprep.subr.mxu0 0.0
        %1505 = vmatpush1.msra.mxu0 0.0
        %1506 = vmatprep.subr.mxu0 0.0
        %1507 = vmatpush1.msra.mxu0 0.0
        %1508 = vmatprep.subr.mxu0 0.0
        %1509 = vmatpush1.msra.mxu0 0.0
        %1510 = vmatprep.subr.mxu0 0.0
        %1511 = vmatpush1.msra.mxu0 0.0
        %1512 = vmatprep.subr.mxu0 0.0
        %1513 = vmatpush1.msra.mxu0 0.0
        %1514 = vmatprep.subr.mxu0 0.0
        %1515 = vmatpush1.msra.mxu0 0.0
        %1516 = vmatprep.subr.mxu0 0.0
        %1517 = vmatpush1.msra.mxu0 0.0
        %1518 = vmatprep.subr.mxu0 0.0
        %1519 = vmatpush1.msra.mxu0 0.0
        %1520 = vmatprep.subr.mxu0 0.0
        %1521 = vmatpush1.msra.mxu0 0.0
        %1522 = vmatprep.mubr.f32.mxu0 0.0
        %1523 = vmatmul.mubr.f32.gmra.mrb[0].mxu0 %v1456
        %v1524 = vpop.f32.mrb[0].mxu0
        %v1525 = vadd.f32 0.0, %v1524
        %v1526 = vpop.f32.mrb[0].mxu0
        %1527 = vdwg.mxu0
        %1528 = vrot.lane.b32.xlu0 %v1271, 80
        %v1529 = vpop.permute.xlu0 %1528
        %v1531 = vmul.f32 %v1160, %v1529
        %1532 = vrot.lane.b32.xlu0 %v1272, 88
        %v1533 = vpop.permute.xlu0 %1532
        %v1535 = vmul.f32 %v1160, %v1533
        %1537 = vrot.lane.b32.xlu0 %v1535, 120
        %v1538 = vpop.permute.xlu0 %1537
        %v1540 = vsub.f32 %v1531, %v1538
        %1541 = vrot.lane.b32.xlu0 %v1272, 80
        %v1542 = vpop.permute.xlu0 %1541
        %v1544 = vmul.f32 %v1160, %v1542
        %1545 = vrot.lane.b32.xlu0 %v1271, 88
        %v1546 = vpop.permute.xlu0 %1545
        %v1548 = vmul.f32 %v1160, %v1546
        %1550 = vrot.lane.b32.xlu0 %v1548, 120
        %v1551 = vpop.permute.xlu0 %1550
        %v1553 = vadd.f32 %v1544, %v1551
        %1555 = vrot.lane.b32.xlu0 %v1540, 48
        %v1556 = vpop.permute.xlu0 %1555
        %1559 = vrot.lane.b32.xlu0 %v1553, 56
        %v1560 = vpop.permute.xlu0 %1559
        %v1562 = vsel %vm1309, %v1556, %v1560
        %1564 = vrot.lane.b32.xlu0 %v1160, 80
        %v1565 = vpop.permute.xlu0 %1564
        %1568 = vrot.lane.b32.xlu0 %v1562, 32
        %v1569 = vpop.permute.xlu0 %1568
        %v1571 = vsel %vm1089, %v1565, %v1569
        %1572 = vrot.lane.b32.xlu0 %v1268, 64
        %v1573 = vpop.permute.xlu0 %1572
        %v1575 = vsel %vm1089, %v1573, %v1358
        %v1577 = vsel %vm1361, %v1571, 0
        %v1580 = vsel %vm1361, %v1575, 0
        %1582 = vmatprep.subr.mxu0 0.0
        %1583 = vmatpush1.xpose.msra.mxu0 %v1580
        %1584 = vmatprep.subr.mxu0 0.0
        %1585 = vmatpush1.xpose.msra.mxu0 0.0
        %1586 = vmatprep.subr.mxu0 0.0
        %1587 = vmatpush1.xpose.msra.mxu0 0.0
        %1588 = vmatprep.subr.mxu0 0.0
        %1589 = vmatpush1.xpose.msra.mxu0 0.0
        %1590 = vmatprep.subr.mxu0 0.0
        %1591 = vmatpush1.xpose.msra.mxu0 0.0
        %1592 = vmatprep.subr.mxu0 0.0
        %1593 = vmatpush1.xpose.msra.mxu0 0.0
        %1594 = vmatprep.subr.mxu0 0.0
        %1595 = vmatpush1.xpose.msra.mxu0 0.0
        %1596 = vmatprep.subr.mxu0 0.0
        %1597 = vmatpush1.xpose.msra.mxu0 0.0
        %1598 = vmatprep.subr.mxu0 0.0
        %1599 = vmatpush1.xpose.msra.mxu0 0.0
        %1600 = vmatprep.subr.mxu0 0.0
        %1601 = vmatpush1.xpose.msra.mxu0 0.0
        %1602 = vmatprep.subr.mxu0 0.0
        %1603 = vmatpush1.xpose.msra.mxu0 0.0
        %1604 = vmatprep.subr.mxu0 0.0
        %1605 = vmatpush1.xpose.msra.mxu0 0.0
        %1606 = vmatprep.subr.mxu0 0.0
        %1607 = vmatpush1.xpose.msra.mxu0 0.0
        %1608 = vmatprep.subr.mxu0 0.0
        %1609 = vmatpush1.xpose.msra.mxu0 0.0
        %1610 = vmatprep.subr.mxu0 0.0
        %1611 = vmatpush1.xpose.msra.mxu0 0.0
        %1612 = vmatprep.subr.mxu0 0.0
        %1613 = vmatpush1.xpose.msra.mxu0 0.0
        %1614 = vmatprep.subr.mxu0 0.0
        %1615 = vmatpush1.xpose.msra.mxu0 0.0
        %1616 = vmatprep.subr.mxu0 0.0
        %1617 = vmatpush1.xpose.msra.mxu0 0.0
        %1618 = vmatprep.subr.mxu0 0.0
        %1619 = vmatpush1.xpose.msra.mxu0 0.0
        %1620 = vmatprep.subr.mxu0 0.0
        %1621 = vmatpush1.xpose.msra.mxu0 0.0
        %1622 = vmatprep.subr.mxu0 0.0
        %1623 = vmatpush1.xpose.msra.mxu0 0.0
        %1624 = vmatprep.subr.mxu0 0.0
        %1625 = vmatpush1.xpose.msra.mxu0 0.0
        %1626 = vmatprep.subr.mxu0 0.0
        %1627 = vmatpush1.xpose.msra.mxu0 0.0
        %1628 = vmatprep.subr.mxu0 0.0
        %1629 = vmatpush1.xpose.msra.mxu0 0.0
        %1630 = vmatprep.subr.mxu0 0.0
        %1631 = vmatpush1.xpose.msra.mxu0 0.0
        %1632 = vmatprep.subr.mxu0 0.0
        %1633 = vmatpush1.xpose.msra.mxu0 0.0
        %1634 = vmatprep.subr.mxu0 0.0
        %1635 = vmatpush1.xpose.msra.mxu0 0.0
        %1636 = vmatprep.subr.mxu0 0.0
        %1637 = vmatpush1.xpose.msra.mxu0 0.0
        %1638 = vmatprep.subr.mxu0 0.0
        %1639 = vmatpush1.xpose.msra.mxu0 0.0
        %1640 = vmatprep.subr.mxu0 0.0
        %1641 = vmatpush1.xpose.msra.mxu0 0.0
        %1642 = vmatprep.subr.mxu0 0.0
        %1643 = vmatpush1.xpose.msra.mxu0 0.0
        %1644 = vmatprep.subr.mxu0 0.0
        %1645 = vmatpush1.xpose.msra.mxu0 0.0
        %1646 = vmatprep.mubr.f32.mxu0 0.0
        %1647 = vmatmul.mubr.f32.gmra.mrb[0].mxu0 %v1577
        %v1648 = vpop.f32.mrb[0].mxu0
        %v1649 = vadd.f32 0.0, %v1648
        %v1650 = vpop.f32.mrb[0].mxu0
        %1651 = vdwg.mxu0
        %v1652 = vmul.f32 %v1649, 0.14433756
        %v1653 = vsel %vm1315, %v1652, -inf
        %v1654 = vsel %vm1309, %v1653, -inf
        %1655 = vmax.xlane.f32.xlu0 %v1654
        %v1656 = vpop.xlane.xlu0 %1655
        %v1657 = vsub.f32 %v1653, %v1656
        %v1658 = vmul.f32 %v1657, 1.442695
        %v1659 = vpow.pop %v1658
        %v1660 = vsel %vm1309, %v1659, 0.0
        %1661 = vadd.xlane.f32.xlu0 %v1660
        %v1662 = vpop.xlane.xlu0 %1661
        %v1663 = vrcp.pop %v1662
        %v1664 = vmul.f32 %v1659, %v1663
        %1665 = vrot.lane.b32.xlu0 %v1268, 32
        %v1666 = vpop.permute.xlu0 %1665
        %v1669 = vsel %vm1309, %v1664, 0
        %1671 = vmatprep.subr.mxu0 0.0
        %1672 = vmatpush1.msra.mxu0 %v1666
        %1673 = vmatprep.subr.mxu0 0.0
        %1674 = vmatpush1.msra.mxu0 0.0
        %1675 = vmatprep.subr.mxu0 0.0
        %1676 = vmatpush1.msra.mxu0 0.0
        %1677 = vmatprep.subr.mxu0 0.0
        %1678 = vmatpush1.msra.mxu0 0.0
        %1679 = vmatprep.subr.mxu0 0.0
        %1680 = vmatpush1.msra.mxu0 0.0
        %1681 = vmatprep.subr.mxu0 0.0
        %1682 = vmatpush1.msra.mxu0 0.0
        %1683 = vmatprep.subr.mxu0 0.0
        %1684 = vmatpush1.msra.mxu0 0.0
        %1685 = vmatprep.subr.mxu0 0.0
        %1686 = vmatpush1.msra.mxu0 0.0
        %1687 = vmatprep.subr.mxu0 0.0
        %1688 = vmatpush1.msra.mxu0 0.0
        %1689 = vmatprep.subr.mxu0 0.0
        %1690 = vmatpush1.msra.mxu0 0.0
        %1691 = vmatprep.subr.mxu0 0.0
        %1692 = vmatpush1.msra.mxu0 0.0
        %1693 = vmatprep.subr.mxu0 0.0
        %1694 = vmatpush1.msra.mxu0 0.0
        %1695 = vmatprep.subr.mxu0 0.0
        %1696 = vmatpush1.msra.mxu0 0.0
        %1697 = vmatprep.subr.mxu0 0.0
        %1698 = vmatpush1.msra.mxu0 0.0
        %1699 = vmatprep.subr.mxu0 0.0
        %1700 = vmatpush1.msra.mxu0 0.0
        %1701 = vmatprep.subr.mxu0 0.0
        %1702 = vmatpush1.msra.mxu0 0.0
        %1703 = vmatprep.subr.mxu0 0.0
        %1704 = vmatpush1.msra.mxu0 0.0
        %1705 = vmatprep.subr.mxu0 0.0
        %1706 = vmatpush1.msra.mxu0 0.0
        %1707 = vmatprep.subr.mxu0 0.0
        %1708 = vmatpush1.msra.mxu0 0.0
        %1709 = vmatprep.subr.mxu0 0.0
        %1710 = vmatpush1.msra.mxu0 0.0
        %1711 = vmatprep.subr.mxu0 0.0
        %1712 = vmatpush1.msra.mxu0 0.0
        %1713 = vmatprep.subr.mxu0 0.0
        %1714 = vmatpush1.msra.mxu0 0.0
        %1715 = vmatprep.subr.mxu0 0.0
        %1716 = vmatpush1.msra.mxu0 0.0
        %1717 = vmatprep.subr.mxu0 0.0
        %1718 = vmatpush1.msra.mxu0 0.0
        %1719 = vmatprep.subr.mxu0 0.0
        %1720 = vmatpush1.msra.mxu0 0.0
        %1721 = vmatprep.subr.mxu0 0.0
        %1722 = vmatpush1.msra.mxu0 0.0
        %1723 = vmatprep.subr.mxu0 0.0
        %1724 = vmatpush1.msra.mxu0 0.0
        %1725 = vmatprep.subr.mxu0 0.0
        %1726 = vmatpush1.msra.mxu0 0.0
        %1727 = vmatprep.subr.mxu0 0.0
        %1728 = vmatpush1.msra.mxu0 0.0
        %1729 = vmatprep.subr.mxu0 0.0
        %1730 = vmatpush1.msra.mxu0 0.0
        %1731 = vmatprep.subr.mxu0 0.0
        %1732 = vmatpush1.msra.mxu0 0.0
        %1733 = vmatprep.subr.mxu0 0.0
        %1734 = vmatpush1.msra.mxu0 0.0
        %1735 = vmatprep.mubr.f32.mxu0 0.0
        %1736 = vmatmul.mubr.f32.gmra.mrb[0].mxu0 %v1669
        %v1737 = vpop.f32.mrb[0].mxu0
        %v1738 = vadd.f32 0.0, %v1737
        %v1739 = vpop.f32.mrb[0].mxu0
        %1740 = vdwg.mxu0
        %1742 = vrot.lane.b32.xlu0 %v1738, 32
        %v1743 = vpop.permute.xlu0 %1742
        %v1745 = vsel %vm1089, %v1525, %v1743
        %v1746 = vld [vmem:[#allocation21] sm:$0xff]
        %v1747 = vld [vmem:[#allocation21 + $0x8] sm:$0xff]
        %v1748 = vld [vmem:[#allocation21 + $0x10] sm:$0xff]
        %v1749 = vld [vmem:[#allocation21 + $0x18] sm:$0xff]
        %v1750 = vld [vmem:[#allocation21 + $0x20] sm:$0xff]
        %v1751 = vld [vmem:[#allocation21 + $0x28] sm:$0xff]
        %v1752 = vld [vmem:[#allocation21 + $0x30] sm:$0xff]
        %v1753 = vld [vmem:[#allocation21 + $0x38] sm:$0xff]
        %v1754 = vld [vmem:[#allocation22] sm:$0x1]
        %v1756 = vlaneseq
        %v1757 = vshrl.u32 %v1756, 7
        %v1758 = vsub.s32 0, %v1757
        %v1759 = vrot.slane %v1754, %v1758
        %v1762 = vsel %vm984, %v1745, 0
        %1764 = vmatprep.subr.mxu0 0.0
        %1765 = vmatpush1.msra.mxu0 %v1746
        %1766 = vmatprep.subr.mxu0 0.0
        %1767 = vmatpush1.msra.mxu0 %v1747
        %1768 = vmatprep.subr.mxu0 0.0
        %1769 = vmatpush1.msra.mxu0 %v1748
        %1770 = vmatprep.subr.mxu0 0.0
        %1771 = vmatpush1.msra.mxu0 %v1749
        %1772 = vmatprep.subr.mxu0 0.0
        %1773 = vmatpush1.msra.mxu0 %v1750
        %1774 = vmatprep.subr.mxu0 0.0
        %1775 = vmatpush1.msra.mxu0 %v1751
        %1776 = vmatprep.subr.mxu0 0.0
        %1777 = vmatpush1.msra.mxu0 %v1752
        %1778 = vmatprep.subr.mxu0 0.0
        %1779 = vmatpush1.msra.mxu0 %v1753
        %1780 = vmatprep.subr.mxu0 0.0
        %1781 = vmatpush1.msra.mxu0 0.0
        %1782 = vmatprep.subr.mxu0 0.0
        %1783 = vmatpush1.msra.mxu0 0.0
        %1784 = vmatprep.subr.mxu0 0.0
        %1785 = vmatpush1.msra.mxu0 0.0
        %1786 = vmatprep.subr.mxu0 0.0
        %1787 = vmatpush1.msra.mxu0 0.0
        %1788 = vmatprep.subr.mxu0 0.0
        %1789 = vmatpush1.msra.mxu0 0.0
        %1790 = vmatprep.subr.mxu0 0.0
        %1791 = vmatpush1.msra.mxu0 0.0
        %1792 = vmatprep.subr.mxu0 0.0
        %1793 = vmatpush1.msra.mxu0 0.0
        %1794 = vmatprep.subr.mxu0 0.0
        %1795 = vmatpush1.msra.mxu0 0.0
        %1796 = vmatprep.subr.mxu0 0.0
        %1797 = vmatpush1.msra.mxu0 0.0
        %1798 = vmatprep.subr.mxu0 0.0
        %1799 = vmatpush1.msra.mxu0 0.0
        %1800 = vmatprep.subr.mxu0 0.0
        %1801 = vmatpush1.msra.mxu0 0.0
        %1802 = vmatprep.subr.mxu0 0.0
        %1803 = vmatpush1.msra.mxu0 0.0
        %1804 = vmatprep.subr.mxu0 0.0
        %1805 = vmatpush1.msra.mxu0 0.0
        %1806 = vmatprep.subr.mxu0 0.0
        %1807 = vmatpush1.msra.mxu0 0.0
        %1808 = vmatprep.subr.mxu0 0.0
        %1809 = vmatpush1.msra.mxu0 0.0
        %1810 = vmatprep.subr.mxu0 0.0
        %1811 = vmatpush1.msra.mxu0 0.0
        %1812 = vmatprep.subr.mxu0 0.0
        %1813 = vmatpush1.msra.mxu0 0.0
        %1814 = vmatprep.subr.mxu0 0.0
        %1815 = vmatpush1.msra.mxu0 0.0
        %1816 = vmatprep.subr.mxu0 0.0
        %1817 = vmatpush1.msra.mxu0 0.0
        %1818 = vmatprep.subr.mxu0 0.0
        %1819 = vmatpush1.msra.mxu0 0.0
        %1820 = vmatprep.subr.mxu0 0.0
        %1821 = vmatpush1.msra.mxu0 0.0
        %1822 = vmatprep.subr.mxu0 0.0
        %1823 = vmatpush1.msra.mxu0 0.0
        %1824 = vmatprep.subr.mxu0 0.0
        %1825 = vmatpush1.msra.mxu0 0.0
        %1826 = vmatprep.subr.mxu0 0.0
        %1827 = vmatpush1.msra.mxu0 0.0
        %1828 = vmatprep.mubr.f32.mxu0 0.0
        %1829 = vmatmul.mubr.f32.gmra.mrb[0].mxu0 %v1762
        %v1830 = vpop.f32.mrb[0].mxu0
        %v1831 = vadd.f32 %v1759, %v1830
        %v1832 = vpop.f32.mrb[0].mxu0
        %1833 = vdwg.mxu0
        %v1834 = vadd.f32 %v948, %v1831
        %s1835 = sld [smem:[#allocation6 + $0x3]]
        %v1836 = vld [vmem:[#allocation10] sm:$0x1]
        %v1837 = vld [vmem:[#allocation12] sm:$0x1]
        %v1838 = vstv %s1835
        %v1839 = vmul.f32 %v1838, %v1834
        %v1840 = vtanh.pop %v1839
        %v1842 = vlaneseq
        %v1843 = vshrl.u32 %v1842, 7
        %v1844 = vsub.s32 0, %v1843
        %v1845 = vrot.slane %v1836, %v1844
        %v1847 = vmul.f32 %v1845, %v1840
        %v1849 = vlaneseq
        %v1850 = vshrl.u32 %v1849, 7
        %v1851 = vsub.s32 0, %v1850
        %v1852 = vrot.slane %v1837, %v1851
        %v1854 = vadd.f32 %v1847, %v1852
        %v1855 = vld [vmem:[%s18] sm:$0xff]
        %v1856 = vld [vmem:[%s18 + $0x8] sm:$0xff]
        %v1857 = vld [vmem:[%s18 + $0x10] sm:$0xff]
        %v1858 = vld [vmem:[%s18 + $0x18] sm:$0xff]
        %v1859 = vld [vmem:[%s18 + $0x20] sm:$0xff]
        %v1860 = vld [vmem:[%s18 + $0x28] sm:$0xff]
        %v1861 = vld [vmem:[%s18 + $0x30] sm:$0xff]
        %v1862 = vld [vmem:[%s18 + $0x38] sm:$0xff]
        %v1863 = vld [vmem:[%s18 + $0x40] sm:$0xff]
        %v1864 = vld [vmem:[%s18 + $0x48] sm:$0xff]
        %v1865 = vld [vmem:[%s18 + $0x50] sm:$0xff]
        %v1866 = vld [vmem:[%s18 + $0x58] sm:$0xff]
        %v1867 = vld [vmem:[%s18 + $0x60] sm:$0xff]
        %v1868 = vld [vmem:[%s18 + $0x68] sm:$0xff]
        %v1869 = vld [vmem:[%s18 + $0x70] sm:$0xff]
        %v1870 = vld [vmem:[%s18 + $0x78] sm:$0xff]
        %v1871 = vld [vmem:[%s19] sm:$0x3]
        %v1873 = vlaneseq
        %v1874 = vshrl.u32 %v1873, 7
        %v1875 = vsub.s32 0, %v1874
        %v1876 = vrot.slane %v1871, %v1875
        %v1877 = vlaneseq
        %v1878 = vshrl.u32 %v1877, 7
        %v1879 = vsub.s32 1, %v1878
        %v1880 = vrot.slane %v1871, %v1879
        %v1884 = vsel %vm984, %v1854, 0
        %1886 = vmatprep.subr.mxu0 %v1856
        %1887 = vmatpush1.msra.mxu0 %v1855
        %1888 = vmatprep.subr.mxu0 %v1858
        %1889 = vmatpush1.msra.mxu0 %v1857
        %1890 = vmatprep.subr.mxu0 %v1860
        %1891 = vmatpush1.msra.mxu0 %v1859
        %1892 = vmatprep.subr.mxu0 %v1862
        %1893 = vmatpush1.msra.mxu0 %v1861
        %1894 = vmatprep.subr.mxu0 %v1864
        %1895 = vmatpush1.msra.mxu0 %v1863
        %1896 = vmatprep.subr.mxu0 %v1866
        %1897 = vmatpush1.msra.mxu0 %v1865
        %1898 = vmatprep.subr.mxu0 %v1868
        %1899 = vmatpush1.msra.mxu0 %v1867
        %1900 = vmatprep.subr.mxu0 %v1870
        %1901 = vmatpush1.msra.mxu0 %v1869
        %1902 = vmatprep.subr.mxu0 0.0
        %1903 = vmatpush1.msra.mxu0 0.0
        %1904 = vmatprep.subr.mxu0 0.0
        %1905 = vmatpush1.msra.mxu0 0.0
        %1906 = vmatprep.subr.mxu0 0.0
        %1907 = vmatpush1.msra.mxu0 0.0
        %1908 = vmatprep.subr.mxu0 0.0
        %1909 = vmatpush1.msra.mxu0 0.0
        %1910 = vmatprep.subr.mxu0 0.0
        %1911 = vmatpush1.msra.mxu0 0.0
        %1912 = vmatprep.subr.mxu0 0.0
        %1913 = vmatpush1.msra.mxu0 0.0
        %1914 = vmatprep.subr.mxu0 0.0
        %1915 = vmatpush1.msra.mxu0 0.0
        %1916 = vmatprep.subr.mxu0 0.0
        %1917 = vmatpush1.msra.mxu0 0.0
        %1918 = vmatprep.subr.mxu0 0.0
        %1919 = vmatpush1.msra.mxu0 0.0
        %1920 = vmatprep.subr.mxu0 0.0
        %1921 = vmatpush1.msra.mxu0 0.0
        %1922 = vmatprep.subr.mxu0 0.0
        %1923 = vmatpush1.msra.mxu0 0.0
        %1924 = vmatprep.subr.mxu0 0.0
        %1925 = vmatpush1.msra.mxu0 0.0
        %1926 = vmatprep.subr.mxu0 0.0
        %1927 = vmatpush1.msra.mxu0 0.0
        %1928 = vmatprep.subr.mxu0 0.0
        %1929 = vmatpush1.msra.mxu0 0.0
        %1930 = vmatprep.subr.mxu0 0.0
        %1931 = vmatpush1.msra.mxu0 0.0
        %1932 = vmatprep.subr.mxu0 0.0
        %1933 = vmatpush1.msra.mxu0 0.0
        %1934 = vmatprep.subr.mxu0 0.0
        %1935 = vmatpush1.msra.mxu0 0.0
        %1936 = vmatprep.subr.mxu0 0.0
        %1937 = vmatpush1.msra.mxu0 0.0
        %1938 = vmatprep.subr.mxu0 0.0
        %1939 = vmatpush1.msra.mxu0 0.0
        %1940 = vmatprep.subr.mxu0 0.0
        %1941 = vmatpush1.msra.mxu0 0.0
        %1942 = vmatprep.subr.mxu0 0.0
        %1943 = vmatpush1.msra.mxu0 0.0
        %1944 = vmatprep.subr.mxu0 0.0
        %1945 = vmatpush1.msra.mxu0 0.0
        %1946 = vmatprep.subr.mxu0 0.0
        %1947 = vmatpush1.msra.mxu0 0.0
        %1948 = vmatprep.subr.mxu0 0.0
        %1949 = vmatpush1.msra.mxu0 0.0
        %1950 = vmatprep.mubr.f32.mxu0 0.0
        %1951 = vmatmul.mubr.f32.gmra.mrb[0].mxu0 %v1884
        %v1952 = vpop.f32.mrb[0].mxu0
        %v1953 = vadd.f32 %v1876, %v1952
        %v1954 = vpop.f32.mrb[0].mxu0
        %v1955 = vadd.f32 %v1880, %v1954
        %1956 = vdwg.mxu0
        %v1957 = vxor.u32 %v1953, 2147483648
        %v1958 = vmul.f32 %v1957, 1.442695
        %v1959 = vpow.pop %v1958
        %v1960 = vadd.f32 %v1959, 1.0
        %v1961 = vrcp.pop %v1960
        %v1962 = vmul.f32 1.0, %v1961
        %v1963 = vmul.f32 %v1953, %v1962
        %v1964 = vmul.f32 %v1963, %v1955
        %v1965 = vld [vmem:[%s20] sm:$0xff]
        %v1966 = vld [vmem:[%s20 + $0x8] sm:$0xff]
        %v1967 = vld [vmem:[%s20 + $0x10] sm:$0xff]
        %v1968 = vld [vmem:[%s20 + $0x18] sm:$0xff]
        %v1969 = vld [vmem:[%s20 + $0x20] sm:$0xff]
        %v1970 = vld [vmem:[%s20 + $0x28] sm:$0xff]
        %v1971 = vld [vmem:[%s20 + $0x30] sm:$0xff]
        %v1972 = vld [vmem:[%s20 + $0x38] sm:$0xff]
        %v1973 = vld [vmem:[%s20 + $0x40] sm:$0xff]
        %v1974 = vld [vmem:[%s20 + $0x48] sm:$0xff]
        %v1975 = vld [vmem:[%s20 + $0x50] sm:$0xff]
        %v1976 = vld [vmem:[%s20 + $0x58] sm:$0xff]
        %v1977 = vld [vmem:[%s20 + $0x60] sm:$0xff]
        %v1978 = vld [vmem:[%s20 + $0x68] sm:$0xff]
        %v1979 = vld [vmem:[%s20 + $0x70] sm:$0xff]
        %v1980 = vld [vmem:[%s20 + $0x78] sm:$0xff]
        %v1981 = vld [vmem:[#allocation24] sm:$0x1]
        %v1983 = vlaneseq
        %v1984 = vshrl.u32 %v1983, 7
        %v1985 = vsub.s32 0, %v1984
        %v1986 = vrot.slane %v1981, %v1985
        %1988 = vmatprep.subr.mxu0 0.0
        %1989 = vmatpush1.msra.mxu0 %v1965
        %1990 = vmatprep.subr.mxu0 0.0
        %1991 = vmatpush1.msra.mxu0 %v1966
        %1992 = vmatprep.subr.mxu0 0.0
        %1993 = vmatpush1.msra.mxu0 %v1967
        %1994 = vmatprep.subr.mxu0 0.0
        %1995 = vmatpush1.msra.mxu0 %v1968
        %1996 = vmatprep.subr.mxu0 0.0
        %1997 = vmatpush1.msra.mxu0 %v1969
        %1998 = vmatprep.subr.mxu0 0.0
        %1999 = vmatpush1.msra.mxu0 %v1970
        %2000 = vmatprep.subr.mxu0 0.0
        %2001 = vmatpush1.msra.mxu0 %v1971
        %2002 = vmatprep.subr.mxu0 0.0
        %2003 = vmatpush1.msra.mxu0 %v1972
        %2004 = vmatprep.subr.mxu0 0.0
        %2005 = vmatpush1.msra.mxu0 %v1973
        %2006 = vmatprep.subr.mxu0 0.0
        %2007 = vmatpush1.msra.mxu0 %v1974
        %2008 = vmatprep.subr.mxu0 0.0
        %2009 = vmatpush1.msra.mxu0 %v1975
        %2010 = vmatprep.subr.mxu0 0.0
        %2011 = vmatpush1.msra.mxu0 %v1976
        %2012 = vmatprep.subr.mxu0 0.0
        %2013 = vmatpush1.msra.mxu0 %v1977
        %2014 = vmatprep.subr.mxu0 0.0
        %2015 = vmatpush1.msra.mxu0 %v1978
        %2016 = vmatprep.subr.mxu0 0.0
        %2017 = vmatpush1.msra.mxu0 %v1979
        %2018 = vmatprep.subr.mxu0 0.0
        %2019 = vmatpush1.msra.mxu0 %v1980
        %2020 = vmatprep.subr.mxu0 0.0
        %2021 = vmatpush1.msra.mxu0 0.0
        %2022 = vmatprep.subr.mxu0 0.0
        %2023 = vmatpush1.msra.mxu0 0.0
        %2024 = vmatprep.subr.mxu0 0.0
        %2025 = vmatpush1.msra.mxu0 0.0
        %2026 = vmatprep.subr.mxu0 0.0
        %2027 = vmatpush1.msra.mxu0 0.0
        %2028 = vmatprep.subr.mxu0 0.0
        %2029 = vmatpush1.msra.mxu0 0.0
        %2030 = vmatprep.subr.mxu0 0.0
        %2031 = vmatpush1.msra.mxu0 0.0
        %2032 = vmatprep.subr.mxu0 0.0
        %2033 = vmatpush1.msra.mxu0 0.0
        %2034 = vmatprep.subr.mxu0 0.0
        %2035 = vmatpush1.msra.mxu0 0.0
        %2036 = vmatprep.subr.mxu0 0.0
        %2037 = vmatpush1.msra.mxu0 0.0
        %2038 = vmatprep.subr.mxu0 0.0
        %2039 = vmatpush1.msra.mxu0 0.0
        %2040 = vmatprep.subr.mxu0 0.0
        %2041 = vmatpush1.msra.mxu0 0.0
        %2042 = vmatprep.subr.mxu0 0.0
        %2043 = vmatpush1.msra.mxu0 0.0
        %2044 = vmatprep.subr.mxu0 0.0
        %2045 = vmatpush1.msra.mxu0 0.0
        %2046 = vmatprep.subr.mxu0 0.0
        %2047 = vmatpush1.msra.mxu0 0.0
        %2048 = vmatprep.subr.mxu0 0.0
        %2049 = vmatpush1.msra.mxu0 0.0
        %2050 = vmatprep.subr.mxu0 0.0
        %2051 = vmatpush1.msra.mxu0 0.0
        %2052 = vmatprep.mubr.f32.mxu0 0.0
        %2053 = vmatmul.mubr.f32.gmra.mrb[0].mxu0 %v1964
        %v2054 = vpop.f32.mrb[0].mxu0
        %v2055 = vadd.f32 %v1986, %v2054
        %v2056 = vpop.f32.mrb[0].mxu0
        %2057 = vdwg.mxu0
        %v2058 = vadd.f32 %v1854, %v2055
        %2059 = vst.msk [vmem:[%s947] sm:$0xff] %vm984, %v2058
        %s2060 = sand.u32 %s566, 1
        %s2061 = scalar_lea.sflag [#allocation4], %s2060
        %s2062 = sand.u32 %s566, 1
        %s2063 = smul.addr %s2062, 8
        %s2064 = scalar_lea.vmem [#allocation28], %s2063
        // Predicated region
        $region181: #{block_forward.1} parent=115 // pred_check
          %p2065 = pneg %p576
        $region182: #{block_forward.1} parent=115 // pred_check_branch
          %2067 = sbr.rel (%p2065) target = $region184
        $region183: #{block_forward.1} parent=115 // pred_region
          %s2069 = ssub.s32 128, 128
          %2070 = vsyncadd %s2061, %s2069
          %s2071 = smul.addr %s49, 128
          %s2072 = scalar_lea.hbm %s24, %s2071
          %s2074 = sshll.u32 %s2064, 4
          %s2075 = int_to_ptr.vmem [resolvable:$true] %s2074
          %2077 = dma.vmem_to_hbm [thread:$0]  %s2075, 128, %s2072, %s2061
        $region184: #{block_forward.1} parent=115 // pred_fallthru
          _
      $region116: #{block_forward.1} parent=5 // pred_fallthru
        _
      %p2078 = scmp.le.s32.totalorder 2, %s44
      // Predicated region
      $region185: #{block_forward.1} parent=5 // pred_check
        %p2079 = pneg %p2078
      $region186: #{block_forward.1} parent=5 // pred_check_branch
        %2081 = sbr.rel (%p2079) target = $region188
      $region187: #{block_forward.1} parent=5 // pred_region
        %s2082 = ssub.s32 %s44, 2
        // Predicated region
        $region189: #{block_forward.1} parent=187 // pred_check
          %p2083 = pneg %p582
        $region190: #{block_forward.1} parent=187 // pred_check_branch
          %2085 = sbr.rel (%p2083) target = $region192
        $region191: #{block_forward.1} parent=187 // pred_region
          %s2086 = sand.u32 %s567, 1
          %s2087 = scalar_lea.sflag [#allocation4], %s2086
          %s2088 = sand.u32 %s567, 1
          %s2089 = smul.addr %s2088, 8
          %s2090 = scalar_lea.vmem [#allocation28], %s2089
          %2091 = dma.done %s2087, 128
        $region192: #{block_forward.1} parent=187 // pred_fallthru
          _
      $region188: #{block_forward.1} parent=5 // pred_fallthru
        _
    $region6: #{block_forward.1} parent=1 // loop_footer
      %s48 = sadd.s32 1, %s44
    $region7: #{block_forward.1} parent=1 // loop_footer_branch
      %43 = sbr.rel target = $region3
    $region8: #{block_forward.1} parent=1 // loop_exit
      _
    %2092 = vsyncpa [#allocation3], 1
    %s2093 = scalar_lea.sflag [#allocation3], 1
    %2094 = vsyncpa %s2093, 1
    %2095 = vsyncpa [#allocation8], 1
    %2096 = vsyncpa [#allocation11], 1
    %2097 = vsyncpa [#allocation14], 1
    %2098 = vsyncpa [#allocation17], 1
    %2099 = vsyncpa [#allocation20], 1
    %2100 = vsyncpa [#allocation23], 1
    %2101 = vsyncpa [#allocation26], 1
    %2102 = vsyncpa [#allocation4], 1
    %s2103 = scalar_lea.sflag [#allocation4], 1
    %2104 = vsyncpa %s2103, 1
    %2105 = vsyncpa [#allocation5], 1
    %s2106 = scalar_lea.sflag [#allocation5], 1
    %2107 = vsyncpa %s2106, 1

</llo_original>
